<compile_context>
chip_gen: v5e
topology: v5e:2x2
jax: 0.10.0
libtpu: 0.0.40
codegen_flags: <defaults>
</compile_context>

<pallas_src>
import jax
import jax.numpy as jnp
from jax import lax
from jax.experimental import pallas as pl
from jax.experimental.pallas import tpu as pltpu

HIDDEN = 128
INPUT = 1
NUM_CLASSES = 2
NUM_LAYERS = 2          # the two layers are unrolled explicitly inside the kernel
STEP_BLOCK = 8          # timesteps per unrolled block (== sublane tile height)


# ----------------------------- Pallas kernel --------------------------------
def _gates_to_state(gates, c):
    """gates: (1, 4H) f32 pre-activations, with the i/f/o columns pre-scaled by
    0.5 in the packed weights/biases; c: (1, H) f32.

    sigmoid(z) = 0.5*tanh(0.5*z) + 0.5, and 0.5*z is already baked into the
    i/f/o columns -> one tanh over the full gate vector + one FMA covers all
    three sigmoids; the g columns are unscaled so tanh(gates_g) is already g.
    """
    t = jnp.tanh(gates)                       # single EUP issue over (1, 4H)
    s = 0.5 * t + 0.5                         # single VPU FMA over (1, 4H)
    i = s[:, 0 * HIDDEN:1 * HIDDEN]
    f = s[:, 1 * HIDDEN:2 * HIDDEN]
    g = t[:, 2 * HIDDEN:3 * HIDDEN]
    o = s[:, 3 * HIDDEN:4 * HIDDEN]
    c_new = f * c + i * g
    h_new = o * jnp.tanh(c_new)
    return h_new, c_new


def lstm_kernel(x_ref, wih0_ref, whh0_ref, b0_ref,
                wih1_ref, whh1_ref, b1_ref,
                out_ref, ih0_scratch):
    T = out_ref.shape[0]                      # padded, multiple of STEP_BLOCK

    # Hoist the layer-0 input projection (+ fused, pre-scaled bias) out of the
    # recurrence: input_size == 1 -> (T,1) * (1,4H) + (1,4H) = (T,4H), one
    # vectorized op.
    ih0_scratch[...] = x_ref[...] * wih0_ref[...] + b0_ref[...]

    def block(blk, carry):
        h0b, c0, h1b, c1 = carry              # h* bf16 (MXU operands), c* f32
        base = pl.multiple_of(blk * STEP_BLOCK, STEP_BLOCK)
        rows = []
        for s in range(STEP_BLOCK):           # bounded static unroll (8 steps)
            # Layer-1 recurrent half FIRST: depends only on h1_{t-1}, so it
            # overlaps with all of layer 0's matmul + gate math below.
            pre1 = jnp.dot(h1b, whh1_ref[...],
                           preferred_element_type=jnp.float32) + b1_ref[...]

            # Layer 0: hoisted input projection + recurrent matmul.
            ih0_t = ih0_scratch[pl.ds(base + s, 1), :]          # (1, 4H) f32
            gates0 = ih0_t + jnp.dot(h0b, whh0_ref[...],
                                     preferred_element_type=jnp.float32)
            h0f, c0 = _gates_to_state(gates0, c0)
            h0b = h0f.astype(jnp.bfloat16)

            # Layer 1: add the h0_t-dependent half.
            gates1 = pre1 + jnp.dot(h0b, wih1_ref[...],
                                    preferred_element_type=jnp.float32)
            h1f, c1 = _gates_to_state(gates1, c1)
            h1b = h1f.astype(jnp.bfloat16)

            rows.append(h1f)                  # keep f32 row for the output tile

        # One full, unmasked (8, 128) tile store per block (no per-step
        # single-sublane masked stores serializing on the same VMEM tile).
        out_ref[pl.ds(base, STEP_BLOCK), :] = jnp.concatenate(rows, axis=0)
        return h0b, c0, h1b, c1

    zeros_bf = jnp.zeros((1, HIDDEN), jnp.bfloat16)
    zeros_f32 = jnp.zeros((1, HIDDEN), jnp.float32)
    lax.fori_loop(0, T // STEP_BLOCK, block,
                  (zeros_bf, zeros_f32, zeros_bf, zeros_f32))


def binary_gesture_lstm(x, lstm_params, fc_params):
    """x: (T, B, 1) f32. Returns (T, NUM_CLASSES) f32 == fc(lstm_out[:, -1, :])."""
    T, B, _ = x.shape
    # Only batch row B-1 ever reaches the output (lstm_out[:, -1, :]); the LSTM
    # recurrence is independent per batch row, so run the recurrence with B=1.
    x_last = x[:, B - 1, :]                                    # (T, 1)

    # Pad T up to a multiple of the 8-step block (extra steps are causal and
    # their rows are sliced off below).
    T_pad = ((T + STEP_BLOCK - 1) // STEP_BLOCK) * STEP_BLOCK
    if T_pad != T:
        x_last = jnp.pad(x_last, ((0, T_pad - T), (0, 0)))

    vmem = pl.BlockSpec(memory_space=pltpu.MemorySpace.VMEM)
    hlast = pl.pallas_call(
        lstm_kernel,
        out_shape=jax.ShapeDtypeStruct((T_pad, HIDDEN), jnp.float32),
        in_specs=[vmem] * (1 + len(lstm_params)),
        out_specs=vmem,
        scratch_shapes=[pltpu.VMEM((T_pad, 4 * HIDDEN), jnp.float32)],  # hoisted ih0
    )(x_last, *lstm_params)

    # Trivial fc done lane-dense outside the kernel: (T,128)@(128,2)+b.
    w_fc_t, b_fc = fc_params
    return hlast[:T] @ w_fc_t + b_fc


# --------------------------- parameter handling ------------------------------
def init_raw_params(key):
    """PyTorch-layout parameters, deterministic uniform(-1/sqrt(H), 1/sqrt(H))."""
    k = 1.0 / (HIDDEN ** 0.5)
    keys = jax.random.split(key, 10)

    def u(kk, shape):
        return jax.random.uniform(kk, shape, jnp.float32, -k, k)

    return dict(
        w_ih0=u(keys[0], (4 * HIDDEN, INPUT)),
        w_hh0=u(keys[1], (4 * HIDDEN, HIDDEN)),
        b_ih0=u(keys[2], (4 * HIDDEN,)),
        b_hh0=u(keys[3], (4 * HIDDEN,)),
        w_ih1=u(keys[4], (4 * HIDDEN, HIDDEN)),
        w_hh1=u(keys[5], (4 * HIDDEN, HIDDEN)),
        b_ih1=u(keys[6], (4 * HIDDEN,)),
        b_hh1=u(keys[7], (4 * HIDDEN,)),
        w_fc=u(keys[8], (NUM_CLASSES, HIDDEN)),
        b_fc=u(keys[9], (NUM_CLASSES,)),
    )


def _scale_ifo(w):
    """Scale the i, f, o gate column blocks (PyTorch order i,f,g,o) by 0.5 so
    that sigmoid(z) == 0.5*tanh(pre) + 0.5 with pre already halved."""
    scale = jnp.concatenate([
        jnp.full((HIDDEN,), 0.5, w.dtype),     # i
        jnp.full((HIDDEN,), 0.5, w.dtype),     # f
        jnp.ones((HIDDEN,), w.dtype),          # g (stays tanh)
        jnp.full((HIDDEN,), 0.5, w.dtype),     # o
    ])
    return w * scale


def pack_kernel_params(p):
    """Transpose / fuse / pre-scale / cast into the layout the kernel expects."""
    wih0 = _scale_ifo(p["w_ih0"].T)                                   # (1, 4H)  f32 (VPU)
    whh0 = _scale_ifo(p["w_hh0"].T).astype(jnp.bfloat16)              # (H, 4H)  bf16 MXU
    b0 = _scale_ifo((p["b_ih0"] + p["b_hh0"]).reshape(1, 4 * HIDDEN))  # fused bias, f32
    wih1 = _scale_ifo(p["w_ih1"].T).astype(jnp.bfloat16)              # (H, 4H)  bf16 MXU
    whh1 = _scale_ifo(p["w_hh1"].T).astype(jnp.bfloat16)              # (H, 4H)  bf16 MXU
    b1 = _scale_ifo((p["b_ih1"] + p["b_hh1"]).reshape(1, 4 * HIDDEN))  # fused bias, f32
    lstm_params = (wih0, whh0, b0, wih1, whh1, b1)
    fc_params = (p["w_fc"].T, p["b_fc"].reshape(1, NUM_CLASSES))       # used in wrapper
    return lstm_params, fc_params


# ------------------------------ pure-JAX reference ---------------------------
def reference_forward(x, p):
    T, B, _ = x.shape

    def cell(ih, h, c, w_hh, b_hh):
        gates = ih + h @ w_hh.T + b_hh
        i = jax.nn.sigmoid(gates[:, 0 * HIDDEN:1 * HIDDEN])
        f = jax.nn.sigmoid(gates[:, 1 * HIDDEN:2 * HIDDEN])
        g = jnp.tanh(gates[:, 2 * HIDDEN:3 * HIDDEN])
        o = jax.nn.sigmoid(gates[:, 3 * HIDDEN:4 * HIDDEN])
        c = f * c + i * g
        return o * jnp.tanh(c), c

    h0 = c0 = h1 = c1 = jnp.zeros((B, HIDDEN), jnp.float32)
    outs = []
    for t in range(T):
        x_t = x[t]                                        # (B, 1)
        h0, c0 = cell(x_t @ p["w_ih0"].T + p["b_ih0"], h0, c0,
                      p["w_hh0"], p["b_hh0"])
        h1, c1 = cell(h0 @ p["w_ih1"].T + p["b_ih1"], h1, c1,
                      p["w_hh1"], p["b_hh1"])
        outs.append(h1)
    lstm_out = jnp.stack(outs)                            # (T, B, H)
    return lstm_out[:, -1, :] @ p["w_fc"].T + p["b_fc"]   # (T, C)


# ----------------------------------- main ------------------------------------
if __name__ == "__main__":
    T, B = 8, 2
    key = jax.random.PRNGKey(0)
    kx, kp = jax.random.split(key)

    x = jax.random.normal(kx, (T, B, INPUT), jnp.float32)
    raw = init_raw_params(kp)
    lstm_params, fc_params = pack_kernel_params(raw)

    out = binary_gesture_lstm(x, lstm_params, fc_params)
    out = jax.block_until_ready(out)

    ref = reference_forward(x, raw)
    assert out.shape == (T, NUM_CLASSES)
    # Tolerance loosened vs. the pure-f32 reference because the recurrent
    # matmuls use bf16 MXU operands (f32 accumulation / f32 gate math).
    assert jnp.allclose(out, ref, atol=2e-2, rtol=2e-2), (out, ref)

    print("KERNEL_OK")
</pallas_src>

<mosaic_0001>
module attributes {stable_mosaic.version = 11 : i64} {
  func.func @lstm_kernel(%arg0: memref<8x1xf32, #tpu.memory_space<vmem>>, %arg1: memref<1x512xf32, #tpu.memory_space<vmem>>, %arg2: memref<128x512xbf16, #tpu.memory_space<vmem>>, %arg3: memref<1x512xf32, #tpu.memory_space<vmem>>, %arg4: memref<128x512xbf16, #tpu.memory_space<vmem>>, %arg5: memref<128x512xbf16, #tpu.memory_space<vmem>>, %arg6: memref<1x512xf32, #tpu.memory_space<vmem>>, %arg7: memref<8x128xf32, #tpu.memory_space<vmem>>, %arg8: memref<8x512xf32, #tpu.memory_space<vmem>>) attributes {dimension_semantics = [], scalar_prefetch = 0 : i64, scratch_operands = 1 : i64, tpu.core_type = #tpu.core_type<tc>} {
    %c0 = arith.constant 0 : index
    %c0_0 = arith.constant 0 : index
    %0 = vector.load %arg0[%c0, %c0_0] : memref<8x1xf32, #tpu.memory_space<vmem>>, vector<8x1xf32>
    %c0_1 = arith.constant 0 : index
    %c0_2 = arith.constant 0 : index
    %1 = vector.load %arg1[%c0_1, %c0_2] : memref<1x512xf32, #tpu.memory_space<vmem>>, vector<1x512xf32>
    %2 = vector.broadcast %0 : vector<8x1xf32> to vector<8x512xf32>
    %3 = vector.broadcast %1 : vector<1x512xf32> to vector<8x512xf32>
    %4 = arith.mulf %2, %3 : vector<8x512xf32>
    %c0_3 = arith.constant 0 : index
    %c0_4 = arith.constant 0 : index
    %5 = vector.load %arg3[%c0_3, %c0_4] : memref<1x512xf32, #tpu.memory_space<vmem>>, vector<1x512xf32>
    %6 = vector.broadcast %5 : vector<1x512xf32> to vector<8x512xf32>
    %7 = arith.addf %4, %6 : vector<8x512xf32>
    %c0_5 = arith.constant 0 : index
    %c0_6 = arith.constant 0 : index
    %8 = vector.load %arg8[%c0_5, %c0_6] : memref<8x512xf32, #tpu.memory_space<vmem>>, vector<8x512xf32>
    tpu.vector_store %arg8[%c0_5, %c0_6], %7 {strides = array<i32>} : memref<8x512xf32, #tpu.memory_space<vmem>>, vector<8x512xf32>,
    %cst = arith.constant 0.000000e+00 : bf16
    %9 = vector.broadcast %cst : bf16 to vector<1x128xbf16>
    %cst_7 = arith.constant 0.000000e+00 : f32
    %10 = vector.broadcast %cst_7 : f32 to vector<1x128xf32>
    %c0_i32 = arith.constant 0 : i32
    %c8_i32 = arith.constant 8 : i32
    %11 = arith.muli %c0_i32, %c8_i32 : i32
    %12 = tpu.assume_multiple %11, 8 : i32
    %c0_8 = arith.constant 0 : index
    %c0_9 = arith.constant 0 : index
    %13 = vector.load %arg5[%c0_8, %c0_9] : memref<128x512xbf16, #tpu.memory_space<vmem>>, vector<128x512xbf16>
    %cst_10 = arith.constant dense<0.000000e+00> : vector<1x512xf32>
    %14 = tpu.matmul %9, %13, %cst_10 {dimension_numbers = #tpu.dot_dimension_numbers<[1], [0], [0], [1], [0, 0, 1, 1], [], []>} : vector<1x128xbf16>, vector<128x512xbf16>, vector<1x512xf32> -> vector<1x512xf32>
    %c0_11 = arith.constant 0 : index
    %c0_12 = arith.constant 0 : index
    %15 = vector.load %arg6[%c0_11, %c0_12] : memref<1x512xf32, #tpu.memory_space<vmem>>, vector<1x512xf32>
    %16 = arith.addf %14, %15 : vector<1x512xf32>
    %c0_i32_13 = arith.constant 0 : i32
    %17 = arith.addi %12, %c0_i32_13 : i32
    %18 = arith.index_cast %17 : i32 to index
    %c0_14 = arith.constant 0 : index
    %19 = vector.load %arg8[%18, %c0_14] : memref<8x512xf32, #tpu.memory_space<vmem>>, vector<1x512xf32>
    %c0_15 = arith.constant 0 : index
    %c0_16 = arith.constant 0 : index
    %20 = vector.load %arg2[%c0_15, %c0_16] : memref<128x512xbf16, #tpu.memory_space<vmem>>, vector<128x512xbf16>
    %cst_17 = arith.constant dense<0.000000e+00> : vector<1x512xf32>
    %21 = tpu.matmul %9, %20, %cst_17 {dimension_numbers = #tpu.dot_dimension_numbers<[1], [0], [0], [1], [0, 0, 1, 1], [], []>} : vector<1x128xbf16>, vector<128x512xbf16>, vector<1x512xf32> -> vector<1x512xf32>
    %22 = arith.addf %19, %21 : vector<1x512xf32>
    %23 = math.tanh %22 : vector<1x512xf32>
    %cst_18 = arith.constant 5.000000e-01 : f32
    %24 = vector.broadcast %cst_18 : f32 to vector<1x512xf32>
    %25 = arith.mulf %24, %23 : vector<1x512xf32>
    %cst_19 = arith.constant 5.000000e-01 : f32
    %26 = vector.broadcast %cst_19 : f32 to vector<1x512xf32>
    %27 = arith.addf %25, %26 : vector<1x512xf32>
    %28 = vector.extract_strided_slice %27 {offsets = [0, 0], sizes = [1, 128], strides = [1, 1]} : vector<1x512xf32> to vector<1x128xf32>
    %29 = vector.extract_strided_slice %27 {offsets = [0, 128], sizes = [1, 128], strides = [1, 1]} : vector<1x512xf32> to vector<1x128xf32>
    %30 = vector.extract_strided_slice %23 {offsets = [0, 256], sizes = [1, 128], strides = [1, 1]} : vector<1x512xf32> to vector<1x128xf32>
    %31 = vector.extract_strided_slice %27 {offsets = [0, 384], sizes = [1, 128], strides = [1, 1]} : vector<1x512xf32> to vector<1x128xf32>
    %32 = arith.mulf %29, %10 : vector<1x128xf32>
    %33 = arith.mulf %28, %30 : vector<1x128xf32>
    %34 = arith.addf %32, %33 : vector<1x128xf32>
    %35 = math.tanh %34 : vector<1x128xf32>
    %36 = arith.mulf %31, %35 : vector<1x128xf32>
    %37 = arith.truncf %36 : vector<1x128xf32> to vector<1x128xbf16>
    %c0_20 = arith.constant 0 : index
    %c0_21 = arith.constant 0 : index
    %38 = vector.load %arg4[%c0_20, %c0_21] : memref<128x512xbf16, #tpu.memory_space<vmem>>, vector<128x512xbf16>
    %cst_22 = arith.constant dense<0.000000e+00> : vector<1x512xf32>
    %39 = tpu.matmul %37, %38, %cst_22 {dimension_numbers = #tpu.dot_dimension_numbers<[1], [0], [0], [1], [0, 0, 1, 1], [], []>} : vector<1x128xbf16>, vector<128x512xbf16>, vector<1x512xf32> -> vector<1x512xf32>
    %40 = arith.addf %16, %39 : vector<1x512xf32>
    %41 = math.tanh %40 : vector<1x512xf32>
    %cst_23 = arith.constant 5.000000e-01 : f32
    %42 = vector.broadcast %cst_23 : f32 to vector<1x512xf32>
    %43 = arith.mulf %42, %41 : vector<1x512xf32>
    %cst_24 = arith.constant 5.000000e-01 : f32
    %44 = vector.broadcast %cst_24 : f32 to vector<1x512xf32>
    %45 = arith.addf %43, %44 : vector<1x512xf32>
    %46 = vector.extract_strided_slice %45 {offsets = [0, 0], sizes = [1, 128], strides = [1, 1]} : vector<1x512xf32> to vector<1x128xf32>
    %47 = vector.extract_strided_slice %45 {offsets = [0, 128], sizes = [1, 128], strides = [1, 1]} : vector<1x512xf32> to vector<1x128xf32>
    %48 = vector.extract_strided_slice %41 {offsets = [0, 256], sizes = [1, 128], strides = [1, 1]} : vector<1x512xf32> to vector<1x128xf32>
    %49 = vector.extract_strided_slice %45 {offsets = [0, 384], sizes = [1, 128], strides = [1, 1]} : vector<1x512xf32> to vector<1x128xf32>
    %50 = arith.mulf %47, %10 : vector<1x128xf32>
    %51 = arith.mulf %46, %48 : vector<1x128xf32>
    %52 = arith.addf %50, %51 : vector<1x128xf32>
    %53 = math.tanh %52 : vector<1x128xf32>
    %54 = arith.mulf %49, %53 : vector<1x128xf32>
    %55 = arith.truncf %54 : vector<1x128xf32> to vector<1x128xbf16>
    %c0_25 = arith.constant 0 : index
    %c0_26 = arith.constant 0 : index
    %56 = vector.load %arg5[%c0_25, %c0_26] : memref<128x512xbf16, #tpu.memory_space<vmem>>, vector<128x512xbf16>
    %cst_27 = arith.constant dense<0.000000e+00> : vector<1x512xf32>
    %57 = tpu.matmul %55, %56, %cst_27 {dimension_numbers = #tpu.dot_dimension_numbers<[1], [0], [0], [1], [0, 0, 1, 1], [], []>} : vector<1x128xbf16>, vector<128x512xbf16>, vector<1x512xf32> -> vector<1x512xf32>
    %c0_28 = arith.constant 0 : index
    %c0_29 = arith.constant 0 : index
    %58 = vector.load %arg6[%c0_28, %c0_29] : memref<1x512xf32, #tpu.memory_space<vmem>>, vector<1x512xf32>
    %59 = arith.addf %57, %58 : vector<1x512xf32>
    %c1_i32 = arith.constant 1 : i32
    %60 = arith.addi %12, %c1_i32 : i32
    %61 = arith.index_cast %60 : i32 to index
    %c0_30 = arith.constant 0 : index
    %62 = vector.load %arg8[%61, %c0_30] : memref<8x512xf32, #tpu.memory_space<vmem>>, vector<1x512xf32>
    %c0_31 = arith.constant 0 : index
    %c0_32 = arith.constant 0 : index
    %63 = vector.load %arg2[%c0_31, %c0_32] : memref<128x512xbf16, #tpu.memory_space<vmem>>, vector<128x512xbf16>
    %cst_33 = arith.constant dense<0.000000e+00> : vector<1x512xf32>
    %64 = tpu.matmul %37, %63, %cst_33 {dimension_numbers = #tpu.dot_dimension_numbers<[1], [0], [0], [1], [0, 0, 1, 1], [], []>} : vector<1x128xbf16>, vector<128x512xbf16>, vector<1x512xf32> -> vector<1x512xf32>
    %65 = arith.addf %62, %64 : vector<1x512xf32>
    %66 = math.tanh %65 : vector<1x512xf32>
    %cst_34 = arith.constant 5.000000e-01 : f32
    %67 = vector.broadcast %cst_34 : f32 to vector<1x512xf32>
    %68 = arith.mulf %67, %66 : vector<1x512xf32>
    %cst_35 = arith.constant 5.000000e-01 : f32
    %69 = vector.broadcast %cst_35 : f32 to vector<1x512xf32>
    %70 = arith.addf %68, %69 : vector<1x512xf32>
    %71 = vector.extract_strided_slice %70 {offsets = [0, 0], sizes = [1, 128], strides = [1, 1]} : vector<1x512xf32> to vector<1x128xf32>
    %72 = vector.extract_strided_slice %70 {offsets = [0, 128], sizes = [1, 128], strides = [1, 1]} : vector<1x512xf32> to vector<1x128xf32>
    %73 = vector.extract_strided_slice %66 {offsets = [0, 256], sizes = [1, 128], strides = [1, 1]} : vector<1x512xf32> to vector<1x128xf32>
    %74 = vector.extract_strided_slice %70 {offsets = [0, 384], sizes = [1, 128], strides = [1, 1]} : vector<1x512xf32> to vector<1x128xf32>
    %75 = arith.mulf %72, %34 : vector<1x128xf32>
    %76 = arith.mulf %71, %73 : vector<1x128xf32>
    %77 = arith.addf %75, %76 : vector<1x128xf32>
    %78 = math.tanh %77 : vector<1x128xf32>
    %79 = arith.mulf %74, %78 : vector<1x128xf32>
    %80 = arith.truncf %79 : vector<1x128xf32> to vector<1x128xbf16>
    %c0_36 = arith.constant 0 : index
    %c0_37 = arith.constant 0 : index
    %81 = vector.load %arg4[%c0_36, %c0_37] : memref<128x512xbf16, #tpu.memory_space<vmem>>, vector<128x512xbf16>
    %cst_38 = arith.constant dense<0.000000e+00> : vector<1x512xf32>
    %82 = tpu.matmul %80, %81, %cst_38 {dimension_numbers = #tpu.dot_dimension_numbers<[1], [0], [0], [1], [0, 0, 1, 1], [], []>} : vector<1x128xbf16>, vector<128x512xbf16>, vector<1x512xf32> -> vector<1x512xf32>
    %83 = arith.addf %59, %82 : vector<1x512xf32>
    %84 = math.tanh %83 : vector<1x512xf32>
    %cst_39 = arith.constant 5.000000e-01 : f32
    %85 = vector.broadcast %cst_39 : f32 to vector<1x512xf32>
    %86 = arith.mulf %85, %84 : vector<1x512xf32>
    %cst_40 = arith.constant 5.000000e-01 : f32
    %87 = vector.broadcast %cst_40 : f32 to vector<1x512xf32>
    %88 = arith.addf %86, %87 : vector<1x512xf32>
    %89 = vector.extract_strided_slice %88 {offsets = [0, 0], sizes = [1, 128], strides = [1, 1]} : vector<1x512xf32> to vector<1x128xf32>
    %90 = vector.extract_strided_slice %88 {offsets = [0, 128], sizes = [1, 128], strides = [1, 1]} : vector<1x512xf32> to vector<1x128xf32>
    %91 = vector.extract_strided_slice %84 {offsets = [0, 256], sizes = [1, 128], strides = [1, 1]} : vector<1x512xf32> to vector<1x128xf32>
    %92 = vector.extract_strided_slice %88 {offsets = [0, 384], sizes = [1, 128], strides = [1, 1]} : vector<1x512xf32> to vector<1x128xf32>
    %93 = arith.mulf %90, %52 : vector<1x128xf32>
    %94 = arith.mulf %89, %91 : vector<1x128xf32>
    %95 = arith.addf %93, %94 : vector<1x128xf32>
    %96 = math.tanh %95 : vector<1x128xf32>
    %97 = arith.mulf %92, %96 : vector<1x128xf32>
    %98 = arith.truncf %97 : vector<1x128xf32> to vector<1x128xbf16>
    %c0_41 = arith.constant 0 : index
    %c0_42 = arith.constant 0 : index
    %99 = vector.load %arg5[%c0_41, %c0_42] : memref<128x512xbf16, #tpu.memory_space<vmem>>, vector<128x512xbf16>
    %cst_43 = arith.constant dense<0.000000e+00> : vector<1x512xf32>
    %100 = tpu.matmul %98, %99, %cst_43 {dimension_numbers = #tpu.dot_dimension_numbers<[1], [0], [0], [1], [0, 0, 1, 1], [], []>} : vector<1x128xbf16>, vector<128x512xbf16>, vector<1x512xf32> -> vector<1x512xf32>
    %c0_44 = arith.constant 0 : index
    %c0_45 = arith.constant 0 : index
    %101 = vector.load %arg6[%c0_44, %c0_45] : memref<1x512xf32, #tpu.memory_space<vmem>>, vector<1x512xf32>
    %102 = arith.addf %100, %101 : vector<1x512xf32>
    %c2_i32 = arith.constant 2 : i32
    %103 = arith.addi %12, %c2_i32 : i32
    %104 = arith.index_cast %103 : i32 to index
    %c0_46 = arith.constant 0 : index
    %105 = vector.load %arg8[%104, %c0_46] : memref<8x512xf32, #tpu.memory_space<vmem>>, vector<1x512xf32>
    %c0_47 = arith.constant 0 : index
    %c0_48 = arith.constant 0 : index
    %106 = vector.load %arg2[%c0_47, %c0_48] : memref<128x512xbf16, #tpu.memory_space<vmem>>, vector<128x512xbf16>
    %cst_49 = arith.constant dense<0.000000e+00> : vector<1x512xf32>
    %107 = tpu.matmul %80, %106, %cst_49 {dimension_numbers = #tpu.dot_dimension_numbers<[1], [0], [0], [1], [0, 0, 1, 1], [], []>} : vector<1x128xbf16>, vector<128x512xbf16>, vector<1x512xf32> -> vector<1x512xf32>
    %108 = arith.addf %105, %107 : vector<1x512xf32>
    %109 = math.tanh %108 : vector<1x512xf32>
    %cst_50 = arith.constant 5.000000e-01 : f32
    %110 = vector.broadcast %cst_50 : f32 to vector<1x512xf32>
    %111 = arith.mulf %110, %109 : vector<1x512xf32>
    %cst_51 = arith.constant 5.000000e-01 : f32
    %112 = vector.broadcast %cst_51 : f32 to vector<1x512xf32>
    %113 = arith.addf %111, %112 : vector<1x512xf32>
    %114 = vector.extract_strided_slice %113 {offsets = [0, 0], sizes = [1, 128], strides = [1, 1]} : vector<1x512xf32> to vector<1x128xf32>
    %115 = vector.extract_strided_slice %113 {offsets = [0, 128], sizes = [1, 128], strides = [1, 1]} : vector<1x512xf32> to vector<1x128xf32>
    %116 = vector.extract_strided_slice %109 {offsets = [0, 256], sizes = [1, 128], strides = [1, 1]} : vector<1x512xf32> to vector<1x128xf32>
    %117 = vector.extract_strided_slice %113 {offsets = [0, 384], sizes = [1, 128], strides = [1, 1]} : vector<1x512xf32> to vector<1x128xf32>
    %118 = arith.mulf %115, %77 : vector<1x128xf32>
    %119 = arith.mulf %114, %116 : vector<1x128xf32>
    %120 = arith.addf %118, %119 : vector<1x128xf32>
    %121 = math.tanh %120 : vector<1x128xf32>
    %122 = arith.mulf %117, %121 : vector<1x128xf32>
    %123 = arith.truncf %122 : vector<1x128xf32> to vector<1x128xbf16>
    %c0_52 = arith.constant 0 : index
    %c0_53 = arith.constant 0 : index
    %124 = vector.load %arg4[%c0_52, %c0_53] : memref<128x512xbf16, #tpu.memory_space<vmem>>, vector<128x512xbf16>
    %cst_54 = arith.constant dense<0.000000e+00> : vector<1x512xf32>
    %125 = tpu.matmul %123, %124, %cst_54 {dimension_numbers = #tpu.dot_dimension_numbers<[1], [0], [0], [1], [0, 0, 1, 1], [], []>} : vector<1x128xbf16>, vector<128x512xbf16>, vector<1x512xf32> -> vector<1x512xf32>
    %126 = arith.addf %102, %125 : vector<1x512xf32>
    %127 = math.tanh %126 : vector<1x512xf32>
    %cst_55 = arith.constant 5.000000e-01 : f32
    %128 = vector.broadcast %cst_55 : f32 to vector<1x512xf32>
    %129 = arith.mulf %128, %127 : vector<1x512xf32>
    %cst_56 = arith.constant 5.000000e-01 : f32
    %130 = vector.broadcast %cst_56 : f32 to vector<1x512xf32>
    %131 = arith.addf %129, %130 : vector<1x512xf32>
    %132 = vector.extract_strided_slice %131 {offsets = [0, 0], sizes = [1, 128], strides = [1, 1]} : vector<1x512xf32> to vector<1x128xf32>
    %133 = vector.extract_strided_slice %131 {offsets = [0, 128], sizes = [1, 128], strides = [1, 1]} : vector<1x512xf32> to vector<1x128xf32>
    %134 = vector.extract_strided_slice %127 {offsets = [0, 256], sizes = [1, 128], strides = [1, 1]} : vector<1x512xf32> to vector<1x128xf32>
    %135 = vector.extract_strided_slice %131 {offsets = [0, 384], sizes = [1, 128], strides = [1, 1]} : vector<1x512xf32> to vector<1x128xf32>
    %136 = arith.mulf %133, %95 : vector<1x128xf32>
    %137 = arith.mulf %132, %134 : vector<1x128xf32>
    %138 = arith.addf %136, %137 : vector<1x128xf32>
    %139 = math.tanh %138 : vector<1x128xf32>
    %140 = arith.mulf %135, %139 : vector<1x128xf32>
    %141 = arith.truncf %140 : vector<1x128xf32> to vector<1x128xbf16>
    %c0_57 = arith.constant 0 : index
    %c0_58 = arith.constant 0 : index
    %142 = vector.load %arg5[%c0_57, %c0_58] : memref<128x512xbf16, #tpu.memory_space<vmem>>, vector<128x512xbf16>
    %cst_59 = arith.constant dense<0.000000e+00> : vector<1x512xf32>
    %143 = tpu.matmul %141, %142, %cst_59 {dimension_numbers = #tpu.dot_dimension_numbers<[1], [0], [0], [1], [0, 0, 1, 1], [], []>} : vector<1x128xbf16>, vector<128x512xbf16>, vector<1x512xf32> -> vector<1x512xf32>
    %c0_60 = arith.constant 0 : index
    %c0_61 = arith.constant 0 : index
    %144 = vector.load %arg6[%c0_60, %c0_61] : memref<1x512xf32, #tpu.memory_space<vmem>>, vector<1x512xf32>
    %145 = arith.addf %143, %144 : vector<1x512xf32>
    %c3_i32 = arith.constant 3 : i32
    %146 = arith.addi %12, %c3_i32 : i32
    %147 = arith.index_cast %146 : i32 to index
    %c0_62 = arith.constant 0 : index
    %148 = vector.load %arg8[%147, %c0_62] : memref<8x512xf32, #tpu.memory_space<vmem>>, vector<1x512xf32>
    %c0_63 = arith.constant 0 : index
    %c0_64 = arith.constant 0 : index
    %149 = vector.load %arg2[%c0_63, %c0_64] : memref<128x512xbf16, #tpu.memory_space<vmem>>, vector<128x512xbf16>
    %cst_65 = arith.constant dense<0.000000e+00> : vector<1x512xf32>
    %150 = tpu.matmul %123, %149, %cst_65 {dimension_numbers = #tpu.dot_dimension_numbers<[1], [0], [0], [1], [0, 0, 1, 1], [], []>} : vector<1x128xbf16>, vector<128x512xbf16>, vector<1x512xf32> -> vector<1x512xf32>
    %151 = arith.addf %148, %150 : vector<1x512xf32>
    %152 = math.tanh %151 : vector<1x512xf32>
    %cst_66 = arith.constant 5.000000e-01 : f32
    %153 = vector.broadcast %cst_66 : f32 to vector<1x512xf32>
    %154 = arith.mulf %153, %152 : vector<1x512xf32>
    %cst_67 = arith.constant 5.000000e-01 : f32
    %155 = vector.broadcast %cst_67 : f32 to vector<1x512xf32>
    %156 = arith.addf %154, %155 : vector<1x512xf32>
    %157 = vector.extract_strided_slice %156 {offsets = [0, 0], sizes = [1, 128], strides = [1, 1]} : vector<1x512xf32> to vector<1x128xf32>
    %158 = vector.extract_strided_slice %156 {offsets = [0, 128], sizes = [1, 128], strides = [1, 1]} : vector<1x512xf32> to vector<1x128xf32>
    %159 = vector.extract_strided_slice %152 {offsets = [0, 256], sizes = [1, 128], strides = [1, 1]} : vector<1x512xf32> to vector<1x128xf32>
    %160 = vector.extract_strided_slice %156 {offsets = [0, 384], sizes = [1, 128], strides = [1, 1]} : vector<1x512xf32> to vector<1x128xf32>
    %161 = arith.mulf %158, %120 : vector<1x128xf32>
    %162 = arith.mulf %157, %159 : vector<1x128xf32>
    %163 = arith.addf %161, %162 : vector<1x128xf32>
    %164 = math.tanh %163 : vector<1x128xf32>
    %165 = arith.mulf %160, %164 : vector<1x128xf32>
    %166 = arith.truncf %165 : vector<1x128xf32> to vector<1x128xbf16>
    %c0_68 = arith.constant 0 : index
    %c0_69 = arith.constant 0 : index
    %167 = vector.load %arg4[%c0_68, %c0_69] : memref<128x512xbf16, #tpu.memory_space<vmem>>, vector<128x512xbf16>
    %cst_70 = arith.constant dense<0.000000e+00> : vector<1x512xf32>
    %168 = tpu.matmul %166, %167, %cst_70 {dimension_numbers = #tpu.dot_dimension_numbers<[1], [0], [0], [1], [0, 0, 1, 1], [], []>} : vector<1x128xbf16>, vector<128x512xbf16>, vector<1x512xf32> -> vector<1x512xf32>
    %169 = arith.addf %145, %168 : vector<1x512xf32>
    %170 = math.tanh %169 : vector<1x512xf32>
    %cst_71 = arith.constant 5.000000e-01 : f32
    %171 = vector.broadcast %cst_71 : f32 to vector<1x512xf32>
    %172 = arith.mulf %171, %170 : vector<1x512xf32>
    %cst_72 = arith.constant 5.000000e-01 : f32
    %173 = vector.broadcast %cst_72 : f32 to vector<1x512xf32>
    %174 = arith.addf %172, %173 : vector<1x512xf32>
    %175 = vector.extract_strided_slice %174 {offsets = [0, 0], sizes = [1, 128], strides = [1, 1]} : vector<1x512xf32> to vector<1x128xf32>
    %176 = vector.extract_strided_slice %174 {offsets = [0, 128], sizes = [1, 128], strides = [1, 1]} : vector<1x512xf32> to vector<1x128xf32>
    %177 = vector.extract_strided_slice %170 {offsets = [0, 256], sizes = [1, 128], strides = [1, 1]} : vector<1x512xf32> to vector<1x128xf32>
    %178 = vector.extract_strided_slice %174 {offsets = [0, 384], sizes = [1, 128], strides = [1, 1]} : vector<1x512xf32> to vector<1x128xf32>
    %179 = arith.mulf %176, %138 : vector<1x128xf32>
    %180 = arith.mulf %175, %177 : vector<1x128xf32>
    %181 = arith.addf %179, %180 : vector<1x128xf32>
    %182 = math.tanh %181 : vector<1x128xf32>
    %183 = arith.mulf %178, %182 : vector<1x128xf32>
    %184 = arith.truncf %183 : vector<1x128xf32> to vector<1x128xbf16>
    %c0_73 = arith.constant 0 : index
    %c0_74 = arith.constant 0 : index
    %185 = vector.load %arg5[%c0_73, %c0_74] : memref<128x512xbf16, #tpu.memory_space<vmem>>, vector<128x512xbf16>
    %cst_75 = arith.constant dense<0.000000e+00> : vector<1x512xf32>
    %186 = tpu.matmul %184, %185, %cst_75 {dimension_numbers = #tpu.dot_dimension_numbers<[1], [0], [0], [1], [0, 0, 1, 1], [], []>} : vector<1x128xbf16>, vector<128x512xbf16>, vector<1x512xf32> -> vector<1x512xf32>
    %c0_76 = arith.constant 0 : index
    %c0_77 = arith.constant 0 : index
    %187 = vector.load %arg6[%c0_76, %c0_77] : memref<1x512xf32, #tpu.memory_space<vmem>>, vector<1x512xf32>
    %188 = arith.addf %186, %187 : vector<1x512xf32>
    %c4_i32 = arith.constant 4 : i32
    %189 = arith.addi %12, %c4_i32 : i32
    %190 = arith.index_cast %189 : i32 to index
    %c0_78 = arith.constant 0 : index
    %191 = vector.load %arg8[%190, %c0_78] : memref<8x512xf32, #tpu.memory_space<vmem>>, vector<1x512xf32>
    %c0_79 = arith.constant 0 : index
    %c0_80 = arith.constant 0 : index
    %192 = vector.load %arg2[%c0_79, %c0_80] : memref<128x512xbf16, #tpu.memory_space<vmem>>, vector<128x512xbf16>
    %cst_81 = arith.constant dense<0.000000e+00> : vector<1x512xf32>
    %193 = tpu.matmul %166, %192, %cst_81 {dimension_numbers = #tpu.dot_dimension_numbers<[1], [0], [0], [1], [0, 0, 1, 1], [], []>} : vector<1x128xbf16>, vector<128x512xbf16>, vector<1x512xf32> -> vector<1x512xf32>
    %194 = arith.addf %191, %193 : vector<1x512xf32>
    %195 = math.tanh %194 : vector<1x512xf32>
    %cst_82 = arith.constant 5.000000e-01 : f32
    %196 = vector.broadcast %cst_82 : f32 to vector<1x512xf32>
    %197 = arith.mulf %196, %195 : vector<1x512xf32>
    %cst_83 = arith.constant 5.000000e-01 : f32
    %198 = vector.broadcast %cst_83 : f32 to vector<1x512xf32>
    %199 = arith.addf %197, %198 : vector<1x512xf32>
    %200 = vector.extract_strided_slice %199 {offsets = [0, 0], sizes = [1, 128], strides = [1, 1]} : vector<1x512xf32> to vector<1x128xf32>
    %201 = vector.extract_strided_slice %199 {offsets = [0, 128], sizes = [1, 128], strides = [1, 1]} : vector<1x512xf32> to vector<1x128xf32>
    %202 = vector.extract_strided_slice %195 {offsets = [0, 256], sizes = [1, 128], strides = [1, 1]} : vector<1x512xf32> to vector<1x128xf32>
    %203 = vector.extract_strided_slice %199 {offsets = [0, 384], sizes = [1, 128], strides = [1, 1]} : vector<1x512xf32> to vector<1x128xf32>
    %204 = arith.mulf %201, %163 : vector<1x128xf32>
    %205 = arith.mulf %200, %202 : vector<1x128xf32>
    %206 = arith.addf %204, %205 : vector<1x128xf32>
    %207 = math.tanh %206 : vector<1x128xf32>
    %208 = arith.mulf %203, %207 : vector<1x128xf32>
    %209 = arith.truncf %208 : vector<1x128xf32> to vector<1x128xbf16>
    %c0_84 = arith.constant 0 : index
    %c0_85 = arith.constant 0 : index
    %210 = vector.load %arg4[%c0_84, %c0_85] : memref<128x512xbf16, #tpu.memory_space<vmem>>, vector<128x512xbf16>
    %cst_86 = arith.constant dense<0.000000e+00> : vector<1x512xf32>
    %211 = tpu.matmul %209, %210, %cst_86 {dimension_numbers = #tpu.dot_dimension_numbers<[1], [0], [0], [1], [0, 0, 1, 1], [], []>} : vector<1x128xbf16>, vector<128x512xbf16>, vector<1x512xf32> -> vector<1x512xf32>
    %212 = arith.addf %188, %211 : vector<1x512xf32>
    %213 = math.tanh %212 : vector<1x512xf32>
    %cst_87 = arith.constant 5.000000e-01 : f32
    %214 = vector.broadcast %cst_87 : f32 to vector<1x512xf32>
    %215 = arith.mulf %214, %213 : vector<1x512xf32>
    %cst_88 = arith.constant 5.000000e-01 : f32
    %216 = vector.broadcast %cst_88 : f32 to vector<1x512xf32>
    %217 = arith.addf %215, %216 : vector<1x512xf32>
    %218 = vector.extract_strided_slice %217 {offsets = [0, 0], sizes = [1, 128], strides = [1, 1]} : vector<1x512xf32> to vector<1x128xf32>
    %219 = vector.extract_strided_slice %217 {offsets = [0, 128], sizes = [1, 128], strides = [1, 1]} : vector<1x512xf32> to vector<1x128xf32>
    %220 = vector.extract_strided_slice %213 {offsets = [0, 256], sizes = [1, 128], strides = [1, 1]} : vector<1x512xf32> to vector<1x128xf32>
    %221 = vector.extract_strided_slice %217 {offsets = [0, 384], sizes = [1, 128], strides = [1, 1]} : vector<1x512xf32> to vector<1x128xf32>
    %222 = arith.mulf %219, %181 : vector<1x128xf32>
    %223 = arith.mulf %218, %220 : vector<1x128xf32>
    %224 = arith.addf %222, %223 : vector<1x128xf32>
    %225 = math.tanh %224 : vector<1x128xf32>
    %226 = arith.mulf %221, %225 : vector<1x128xf32>
    %227 = arith.truncf %226 : vector<1x128xf32> to vector<1x128xbf16>
    %c0_89 = arith.constant 0 : index
    %c0_90 = arith.constant 0 : index
    %228 = vector.load %arg5[%c0_89, %c0_90] : memref<128x512xbf16, #tpu.memory_space<vmem>>, vector<128x512xbf16>
    %cst_91 = arith.constant dense<0.000000e+00> : vector<1x512xf32>
    %229 = tpu.matmul %227, %228, %cst_91 {dimension_numbers = #tpu.dot_dimension_numbers<[1], [0], [0], [1], [0, 0, 1, 1], [], []>} : vector<1x128xbf16>, vector<128x512xbf16>, vector<1x512xf32> -> vector<1x512xf32>
    %c0_92 = arith.constant 0 : index
    %c0_93 = arith.constant 0 : index
    %230 = vector.load %arg6[%c0_92, %c0_93] : memref<1x512xf32, #tpu.memory_space<vmem>>, vector<1x512xf32>
    %231 = arith.addf %229, %230 : vector<1x512xf32>
    %c5_i32 = arith.constant 5 : i32
    %232 = arith.addi %12, %c5_i32 : i32
    %233 = arith.index_cast %232 : i32 to index
    %c0_94 = arith.constant 0 : index
    %234 = vector.load %arg8[%233, %c0_94] : memref<8x512xf32, #tpu.memory_space<vmem>>, vector<1x512xf32>
    %c0_95 = arith.constant 0 : index
    %c0_96 = arith.constant 0 : index
    %235 = vector.load %arg2[%c0_95, %c0_96] : memref<128x512xbf16, #tpu.memory_space<vmem>>, vector<128x512xbf16>
    %cst_97 = arith.constant dense<0.000000e+00> : vector<1x512xf32>
    %236 = tpu.matmul %209, %235, %cst_97 {dimension_numbers = #tpu.dot_dimension_numbers<[1], [0], [0], [1], [0, 0, 1, 1], [], []>} : vector<1x128xbf16>, vector<128x512xbf16>, vector<1x512xf32> -> vector<1x512xf32>
    %237 = arith.addf %234, %236 : vector<1x512xf32>
    %238 = math.tanh %237 : vector<1x512xf32>
    %cst_98 = arith.constant 5.000000e-01 : f32
    %239 = vector.broadcast %cst_98 : f32 to vector<1x512xf32>
    %240 = arith.mulf %239, %238 : vector<1x512xf32>
    %cst_99 = arith.constant 5.000000e-01 : f32
    %241 = vector.broadcast %cst_99 : f32 to vector<1x512xf32>
    %242 = arith.addf %240, %241 : vector<1x512xf32>
    %243 = vector.extract_strided_slice %242 {offsets = [0, 0], sizes = [1, 128], strides = [1, 1]} : vector<1x512xf32> to vector<1x128xf32>
    %244 = vector.extract_strided_slice %242 {offsets = [0, 128], sizes = [1, 128], strides = [1, 1]} : vector<1x512xf32> to vector<1x128xf32>
    %245 = vector.extract_strided_slice %238 {offsets = [0, 256], sizes = [1, 128], strides = [1, 1]} : vector<1x512xf32> to vector<1x128xf32>
    %246 = vector.extract_strided_slice %242 {offsets = [0, 384], sizes = [1, 128], strides = [1, 1]} : vector<1x512xf32> to vector<1x128xf32>
    %247 = arith.mulf %244, %206 : vector<1x128xf32>
    %248 = arith.mulf %243, %245 : vector<1x128xf32>
    %249 = arith.addf %247, %248 : vector<1x128xf32>
    %250 = math.tanh %249 : vector<1x128xf32>
    %251 = arith.mulf %246, %250 : vector<1x128xf32>
    %252 = arith.truncf %251 : vector<1x128xf32> to vector<1x128xbf16>
    %c0_100 = arith.constant 0 : index
    %c0_101 = arith.constant 0 : index
    %253 = vector.load %arg4[%c0_100, %c0_101] : memref<128x512xbf16, #tpu.memory_space<vmem>>, vector<128x512xbf16>
    %cst_102 = arith.constant dense<0.000000e+00> : vector<1x512xf32>
    %254 = tpu.matmul %252, %253, %cst_102 {dimension_numbers = #tpu.dot_dimension_numbers<[1], [0], [0], [1], [0, 0, 1, 1], [], []>} : vector<1x128xbf16>, vector<128x512xbf16>, vector<1x512xf32> -> vector<1x512xf32>
    %255 = arith.addf %231, %254 : vector<1x512xf32>
    %256 = math.tanh %255 : vector<1x512xf32>
    %cst_103 = arith.constant 5.000000e-01 : f32
    %257 = vector.broadcast %cst_103 : f32 to vector<1x512xf32>
    %258 = arith.mulf %257, %256 : vector<1x512xf32>
    %cst_104 = arith.constant 5.000000e-01 : f32
    %259 = vector.broadcast %cst_104 : f32 to vector<1x512xf32>
    %260 = arith.addf %258, %259 : vector<1x512xf32>
    %261 = vector.extract_strided_slice %260 {offsets = [0, 0], sizes = [1, 128], strides = [1, 1]} : vector<1x512xf32> to vector<1x128xf32>
    %262 = vector.extract_strided_slice %260 {offsets = [0, 128], sizes = [1, 128], strides = [1, 1]} : vector<1x512xf32> to vector<1x128xf32>
    %263 = vector.extract_strided_slice %256 {offsets = [0, 256], sizes = [1, 128], strides = [1, 1]} : vector<1x512xf32> to vector<1x128xf32>
    %264 = vector.extract_strided_slice %260 {offsets = [0, 384], sizes = [1, 128], strides = [1, 1]} : vector<1x512xf32> to vector<1x128xf32>
    %265 = arith.mulf %262, %224 : vector<1x128xf32>
    %266 = arith.mulf %261, %263 : vector<1x128xf32>
    %267 = arith.addf %265, %266 : vector<1x128xf32>
    %268 = math.tanh %267 : vector<1x128xf32>
    %269 = arith.mulf %264, %268 : vector<1x128xf32>
    %270 = arith.truncf %269 : vector<1x128xf32> to vector<1x128xbf16>
    %c0_105 = arith.constant 0 : index
    %c0_106 = arith.constant 0 : index
    %271 = vector.load %arg5[%c0_105, %c0_106] : memref<128x512xbf16, #tpu.memory_space<vmem>>, vector<128x512xbf16>
    %cst_107 = arith.constant dense<0.000000e+00> : vector<1x512xf32>
    %272 = tpu.matmul %270, %271, %cst_107 {dimension_numbers = #tpu.dot_dimension_numbers<[1], [0], [0], [1], [0, 0, 1, 1], [], []>} : vector<1x128xbf16>, vector<128x512xbf16>, vector<1x512xf32> -> vector<1x512xf32>
    %c0_108 = arith.constant 0 : index
    %c0_109 = arith.constant 0 : index
    %273 = vector.load %arg6[%c0_108, %c0_109] : memref<1x512xf32, #tpu.memory_space<vmem>>, vector<1x512xf32>
    %274 = arith.addf %272, %273 : vector<1x512xf32>
    %c6_i32 = arith.constant 6 : i32
    %275 = arith.addi %12, %c6_i32 : i32
    %276 = arith.index_cast %275 : i32 to index
    %c0_110 = arith.constant 0 : index
    %277 = vector.load %arg8[%276, %c0_110] : memref<8x512xf32, #tpu.memory_space<vmem>>, vector<1x512xf32>
    %c0_111 = arith.constant 0 : index
    %c0_112 = arith.constant 0 : index
    %278 = vector.load %arg2[%c0_111, %c0_112] : memref<128x512xbf16, #tpu.memory_space<vmem>>, vector<128x512xbf16>
    %cst_113 = arith.constant dense<0.000000e+00> : vector<1x512xf32>
    %279 = tpu.matmul %252, %278, %cst_113 {dimension_numbers = #tpu.dot_dimension_numbers<[1], [0], [0], [1], [0, 0, 1, 1], [], []>} : vector<1x128xbf16>, vector<128x512xbf16>, vector<1x512xf32> -> vector<1x512xf32>
    %280 = arith.addf %277, %279 : vector<1x512xf32>
    %281 = math.tanh %280 : vector<1x512xf32>
    %cst_114 = arith.constant 5.000000e-01 : f32
    %282 = vector.broadcast %cst_114 : f32 to vector<1x512xf32>
    %283 = arith.mulf %282, %281 : vector<1x512xf32>
    %cst_115 = arith.constant 5.000000e-01 : f32
    %284 = vector.broadcast %cst_115 : f32 to vector<1x512xf32>
    %285 = arith.addf %283, %284 : vector<1x512xf32>
    %286 = vector.extract_strided_slice %285 {offsets = [0, 0], sizes = [1, 128], strides = [1, 1]} : vector<1x512xf32> to vector<1x128xf32>
    %287 = vector.extract_strided_slice %285 {offsets = [0, 128], sizes = [1, 128], strides = [1, 1]} : vector<1x512xf32> to vector<1x128xf32>
    %288 = vector.extract_strided_slice %281 {offsets = [0, 256], sizes = [1, 128], strides = [1, 1]} : vector<1x512xf32> to vector<1x128xf32>
    %289 = vector.extract_strided_slice %285 {offsets = [0, 384], sizes = [1, 128], strides = [1, 1]} : vector<1x512xf32> to vector<1x128xf32>
    %290 = arith.mulf %287, %249 : vector<1x128xf32>
    %291 = arith.mulf %286, %288 : vector<1x128xf32>
    %292 = arith.addf %290, %291 : vector<1x128xf32>
    %293 = math.tanh %292 : vector<1x128xf32>
    %294 = arith.mulf %289, %293 : vector<1x128xf32>
    %295 = arith.truncf %294 : vector<1x128xf32> to vector<1x128xbf16>
    %c0_116 = arith.constant 0 : index
    %c0_117 = arith.constant 0 : index
    %296 = vector.load %arg4[%c0_116, %c0_117] : memref<128x512xbf16, #tpu.memory_space<vmem>>, vector<128x512xbf16>
    %cst_118 = arith.constant dense<0.000000e+00> : vector<1x512xf32>
    %297 = tpu.matmul %295, %296, %cst_118 {dimension_numbers = #tpu.dot_dimension_numbers<[1], [0], [0], [1], [0, 0, 1, 1], [], []>} : vector<1x128xbf16>, vector<128x512xbf16>, vector<1x512xf32> -> vector<1x512xf32>
    %298 = arith.addf %274, %297 : vector<1x512xf32>
    %299 = math.tanh %298 : vector<1x512xf32>
    %cst_119 = arith.constant 5.000000e-01 : f32
    %300 = vector.broadcast %cst_119 : f32 to vector<1x512xf32>
    %301 = arith.mulf %300, %299 : vector<1x512xf32>
    %cst_120 = arith.constant 5.000000e-01 : f32
    %302 = vector.broadcast %cst_120 : f32 to vector<1x512xf32>
    %303 = arith.addf %301, %302 : vector<1x512xf32>
    %304 = vector.extract_strided_slice %303 {offsets = [0, 0], sizes = [1, 128], strides = [1, 1]} : vector<1x512xf32> to vector<1x128xf32>
    %305 = vector.extract_strided_slice %303 {offsets = [0, 128], sizes = [1, 128], strides = [1, 1]} : vector<1x512xf32> to vector<1x128xf32>
    %306 = vector.extract_strided_slice %299 {offsets = [0, 256], sizes = [1, 128], strides = [1, 1]} : vector<1x512xf32> to vector<1x128xf32>
    %307 = vector.extract_strided_slice %303 {offsets = [0, 384], sizes = [1, 128], strides = [1, 1]} : vector<1x512xf32> to vector<1x128xf32>
    %308 = arith.mulf %305, %267 : vector<1x128xf32>
    %309 = arith.mulf %304, %306 : vector<1x128xf32>
    %310 = arith.addf %308, %309 : vector<1x128xf32>
    %311 = math.tanh %310 : vector<1x128xf32>
    %312 = arith.mulf %307, %311 : vector<1x128xf32>
    %313 = arith.truncf %312 : vector<1x128xf32> to vector<1x128xbf16>
    %c0_121 = arith.constant 0 : index
    %c0_122 = arith.constant 0 : index
    %314 = vector.load %arg5[%c0_121, %c0_122] : memref<128x512xbf16, #tpu.memory_space<vmem>>, vector<128x512xbf16>
    %cst_123 = arith.constant dense<0.000000e+00> : vector<1x512xf32>
    %315 = tpu.matmul %313, %314, %cst_123 {dimension_numbers = #tpu.dot_dimension_numbers<[1], [0], [0], [1], [0, 0, 1, 1], [], []>} : vector<1x128xbf16>, vector<128x512xbf16>, vector<1x512xf32> -> vector<1x512xf32>
    %c0_124 = arith.constant 0 : index
    %c0_125 = arith.constant 0 : index
    %316 = vector.load %arg6[%c0_124, %c0_125] : memref<1x512xf32, #tpu.memory_space<vmem>>, vector<1x512xf32>
    %317 = arith.addf %315, %316 : vector<1x512xf32>
    %c7_i32 = arith.constant 7 : i32
    %318 = arith.addi %12, %c7_i32 : i32
    %319 = arith.index_cast %318 : i32 to index
    %c0_126 = arith.constant 0 : index
    %320 = vector.load %arg8[%319, %c0_126] : memref<8x512xf32, #tpu.memory_space<vmem>>, vector<1x512xf32>
    %c0_127 = arith.constant 0 : index
    %c0_128 = arith.constant 0 : index
    %321 = vector.load %arg2[%c0_127, %c0_128] : memref<128x512xbf16, #tpu.memory_space<vmem>>, vector<128x512xbf16>
    %cst_129 = arith.constant dense<0.000000e+00> : vector<1x512xf32>
    %322 = tpu.matmul %295, %321, %cst_129 {dimension_numbers = #tpu.dot_dimension_numbers<[1], [0], [0], [1], [0, 0, 1, 1], [], []>} : vector<1x128xbf16>, vector<128x512xbf16>, vector<1x512xf32> -> vector<1x512xf32>
    %323 = arith.addf %320, %322 : vector<1x512xf32>
    %324 = math.tanh %323 : vector<1x512xf32>
    %cst_130 = arith.constant 5.000000e-01 : f32
    %325 = vector.broadcast %cst_130 : f32 to vector<1x512xf32>
    %326 = arith.mulf %325, %324 : vector<1x512xf32>
    %cst_131 = arith.constant 5.000000e-01 : f32
    %327 = vector.broadcast %cst_131 : f32 to vector<1x512xf32>
    %328 = arith.addf %326, %327 : vector<1x512xf32>
    %329 = vector.extract_strided_slice %328 {offsets = [0, 0], sizes = [1, 128], strides = [1, 1]} : vector<1x512xf32> to vector<1x128xf32>
    %330 = vector.extract_strided_slice %328 {offsets = [0, 128], sizes = [1, 128], strides = [1, 1]} : vector<1x512xf32> to vector<1x128xf32>
    %331 = vector.extract_strided_slice %324 {offsets = [0, 256], sizes = [1, 128], strides = [1, 1]} : vector<1x512xf32> to vector<1x128xf32>
    %332 = vector.extract_strided_slice %328 {offsets = [0, 384], sizes = [1, 128], strides = [1, 1]} : vector<1x512xf32> to vector<1x128xf32>
    %333 = arith.mulf %330, %292 : vector<1x128xf32>
    %334 = arith.mulf %329, %331 : vector<1x128xf32>
    %335 = arith.addf %333, %334 : vector<1x128xf32>
    %336 = math.tanh %335 : vector<1x128xf32>
    %337 = arith.mulf %332, %336 : vector<1x128xf32>
    %338 = arith.truncf %337 : vector<1x128xf32> to vector<1x128xbf16>
    %c0_132 = arith.constant 0 : index
    %c0_133 = arith.constant 0 : index
    %339 = vector.load %arg4[%c0_132, %c0_133] : memref<128x512xbf16, #tpu.memory_space<vmem>>, vector<128x512xbf16>
    %cst_134 = arith.constant dense<0.000000e+00> : vector<1x512xf32>
    %340 = tpu.matmul %338, %339, %cst_134 {dimension_numbers = #tpu.dot_dimension_numbers<[1], [0], [0], [1], [0, 0, 1, 1], [], []>} : vector<1x128xbf16>, vector<128x512xbf16>, vector<1x512xf32> -> vector<1x512xf32>
    %341 = arith.addf %317, %340 : vector<1x512xf32>
    %342 = math.tanh %341 : vector<1x512xf32>
    %cst_135 = arith.constant 5.000000e-01 : f32
    %343 = vector.broadcast %cst_135 : f32 to vector<1x512xf32>
    %344 = arith.mulf %343, %342 : vector<1x512xf32>
    %cst_136 = arith.constant 5.000000e-01 : f32
    %345 = vector.broadcast %cst_136 : f32 to vector<1x512xf32>
    %346 = arith.addf %344, %345 : vector<1x512xf32>
    %347 = vector.extract_strided_slice %346 {offsets = [0, 0], sizes = [1, 128], strides = [1, 1]} : vector<1x512xf32> to vector<1x128xf32>
    %348 = vector.extract_strided_slice %346 {offsets = [0, 128], sizes = [1, 128], strides = [1, 1]} : vector<1x512xf32> to vector<1x128xf32>
    %349 = vector.extract_strided_slice %342 {offsets = [0, 256], sizes = [1, 128], strides = [1, 1]} : vector<1x512xf32> to vector<1x128xf32>
    %350 = vector.extract_strided_slice %346 {offsets = [0, 384], sizes = [1, 128], strides = [1, 1]} : vector<1x512xf32> to vector<1x128xf32>
    %351 = arith.mulf %348, %310 : vector<1x128xf32>
    %352 = arith.mulf %347, %349 : vector<1x128xf32>
    %353 = arith.addf %351, %352 : vector<1x128xf32>
    %354 = math.tanh %353 : vector<1x128xf32>
    %355 = arith.mulf %350, %354 : vector<1x128xf32>
    %356 = arith.truncf %355 : vector<1x128xf32> to vector<1x128xbf16>
    %357 = tpu.concatenate %54, %97, %140, %183, %226, %269, %312, %355 in 0 : vector<1x128xf32>, vector<1x128xf32>, vector<1x128xf32>, vector<1x128xf32>, vector<1x128xf32>, vector<1x128xf32>, vector<1x128xf32>, vector<1x128xf32> -> vector<8x128xf32>
    %358 = arith.index_cast %12 : i32 to index
    %c0_137 = arith.constant 0 : index
    %359 = vector.load %arg7[%358, %c0_137] : memref<8x128xf32, #tpu.memory_space<vmem>>, vector<8x128xf32>
    tpu.vector_store %arg7[%358, %c0_137], %357 {strides = array<i32>} : memref<8x128xf32, #tpu.memory_space<vmem>>, vector<8x128xf32>,
    %c1_i32_138 = arith.constant 1 : i32
    return
  }
}

</mosaic_0001>

<llo_original>
// kernel: tpu_custom_call.1
$region0: #{tpu_custom_call.1}
  #allocation0 [shape = 'u32[]', space=smem, size = 0x4, offset = 0x4, fixed_abs, tag = 'smem constant byte address 0x4 - core index']
  #allocation1 [shape = 'u32[72,128]{1,0:T(1,128)}', space=vmem, size = 0x9000, scoped, tag = 'internal scratch']
  #allocation2 [shape = 'f32[8,512]{1,0:T(8,128)}', space=vmem, size = 0x4000, scoped, tag = 'scratch operand']
  %s0 = inlined_call_operand.vmem [shape: f32[8,1], index: 0, kind: input, shape index: {}]
  %s1 = inlined_call_operand.vmem [shape: f32[1,512], index: 1, kind: input, shape index: {}]
  %s2 = inlined_call_operand.hbm [shape: bf16[128,512], index: 2, kind: input, shape index: {}]
  %s3 = inlined_call_operand.vmem [shape: f32[1,512], index: 3, kind: input, shape index: {}]
  %s4 = inlined_call_operand.hbm [shape: bf16[128,512], index: 4, kind: input, shape index: {}]
  %s5 = inlined_call_operand.hbm [shape: bf16[128,512], index: 5, kind: input, shape index: {}]
  %s6 = inlined_call_operand.vmem [shape: f32[1,512], index: 6, kind: input, shape index: {}]
  %s7 = inlined_call_operand.hbm [shape: f32[8,128], index: 7, kind: output, shape index: {}]
  %s8 = sld [smem:[#allocation0]]
  $region50: #{tpu_custom_call.1} parent=0
    _
  %s10 = ssub.s32 1, %s8
  %s11 = scalar_select 0, %s10, %s8
  $region1: #{tpu_custom_call.1} parent=0
    #allocation3 [shape = 'u8[131072]{0}', space=vmem, size = 0x20000, scoped, tag = 'input window, operand 2, single buffered']
    #allocation4 [shape = 's32[1]{0}', space=sflag, size = 0x4, scoped, tag = 'scoped memory for tpu_custom_call.1']
    #allocation5 [shape = 's32[1]{0}', space=sflag, size = 0x4, scoped, tag = 'scoped memory for tpu_custom_call.1']
    #allocation6 [shape = 'u8[131072]{0}', space=vmem, size = 0x20000, scoped, tag = 'input window, operand 4, single buffered']
    #allocation7 [shape = 's32[1]{0}', space=sflag, size = 0x4, scoped, tag = 'scoped memory for tpu_custom_call.1']
    #allocation8 [shape = 'u8[131072]{0}', space=vmem, size = 0x20000, scoped, tag = 'input window, operand 5, single buffered']
    #allocation9 [shape = 'u8[4096]{0}', space=vmem, size = 0x1000, scoped, tag = 'output window, operand 0, single buffered']
    %12 = vsyncpa [#allocation4], 0
    %13 = vsyncpa [#allocation7], 0
    %14 = vsyncpa [#allocation5], 0
    // Predicated region
    $region2: #{tpu_custom_call.1} parent=1 // pred_check
      _
    $region3: #{tpu_custom_call.1} parent=1 // pred_check_branch
      %16 = sbr.rel (0) target = $region5
    $region4: #{tpu_custom_call.1} parent=1 // pred_region
      _
    $region5: #{tpu_custom_call.1} parent=1 // pred_fallthru
      _
    // Predicated region
    $region6: #{tpu_custom_call.1} parent=1 // pred_check
      _
    $region7: #{tpu_custom_call.1} parent=1 // pred_check_branch
      %18 = sbr.rel (0) target = $region9
    $region8: #{tpu_custom_call.1} parent=1 // pred_region
      _
    $region9: #{tpu_custom_call.1} parent=1 // pred_fallthru
      _
    // Predicated region
    $region10: #{tpu_custom_call.1} parent=1 // pred_check
      _
    $region11: #{tpu_custom_call.1} parent=1 // pred_check_branch
      %20 = sbr.rel (0) target = $region13
    $region12: #{tpu_custom_call.1} parent=1 // pred_region
      %22 = vsyncadd [#allocation4], 0
      %s23 = sshll.u32 %s2, 4
      %s24 = int_to_ptr.hbm [resolvable:$true] %s23
      %s25 = sshll.u32 [#allocation3], 4
      %s26 = int_to_ptr.vmem [resolvable:$true] %s25
      %31 = dma.hbm_to_vmem [thread:$0]  %s24, 4096, %s26, [#allocation4], 256, 256, 16
    $region13: #{tpu_custom_call.1} parent=1 // pred_fallthru
      _
    // Predicated region
    $region14: #{tpu_custom_call.1} parent=1 // pred_check
      _
    $region15: #{tpu_custom_call.1} parent=1 // pred_check_branch
      %33 = sbr.rel (0) target = $region17
    $region16: #{tpu_custom_call.1} parent=1 // pred_region
      _
    $region17: #{tpu_custom_call.1} parent=1 // pred_fallthru
      _
    // Predicated region
    $region18: #{tpu_custom_call.1} parent=1 // pred_check
      _
    $region19: #{tpu_custom_call.1} parent=1 // pred_check_branch
      %35 = sbr.rel (0) target = $region21
    $region20: #{tpu_custom_call.1} parent=1 // pred_region
      %37 = vsyncadd [#allocation7], 0
      %s38 = sshll.u32 %s4, 4
      %s39 = int_to_ptr.hbm [resolvable:$true] %s38
      %s40 = sshll.u32 [#allocation6], 4
      %s41 = int_to_ptr.vmem [resolvable:$true] %s40
      %46 = dma.hbm_to_vmem [thread:$0]  %s39, 4096, %s41, [#allocation7], 256, 256, 16
    $region21: #{tpu_custom_call.1} parent=1 // pred_fallthru
      _
    // Predicated region
    $region22: #{tpu_custom_call.1} parent=1 // pred_check
      _
    $region23: #{tpu_custom_call.1} parent=1 // pred_check_branch
      %48 = sbr.rel (0) target = $region25
    $region24: #{tpu_custom_call.1} parent=1 // pred_region
      %50 = vsyncadd [#allocation7], 0
      %s51 = sshll.u32 %s5, 4
      %s52 = int_to_ptr.hbm [resolvable:$true] %s51
      %s53 = sshll.u32 [#allocation8], 4
      %s54 = int_to_ptr.vmem [resolvable:$true] %s53
      %59 = dma.hbm_to_vmem [thread:$0]  %s52, 4096, %s54, [#allocation7], 256, 256, 16
    $region25: #{tpu_custom_call.1} parent=1 // pred_fallthru
      _
    // Predicated region
    $region26: #{tpu_custom_call.1} parent=1 // pred_check
      _
    $region27: #{tpu_custom_call.1} parent=1 // pred_check_branch
      %61 = sbr.rel (0) target = $region29
    $region28: #{tpu_custom_call.1} parent=1 // pred_region
      _
    $region29: #{tpu_custom_call.1} parent=1 // pred_fallthru
      _
    // Predicated region
    $region30: #{tpu_custom_call.1} parent=1 // pred_check
      _
    $region31: #{tpu_custom_call.1} parent=1 // pred_check_branch
      %63 = sbr.rel (0) target = $region33
    $region32: #{tpu_custom_call.1} parent=1 // pred_region
      %65 = dma.done [#allocation4], 4096
    $region33: #{tpu_custom_call.1} parent=1 // pred_fallthru
      _
    // Predicated region
    $region34: #{tpu_custom_call.1} parent=1 // pred_check
      _
    $region35: #{tpu_custom_call.1} parent=1 // pred_check_branch
      %67 = sbr.rel (0) target = $region37
    $region36: #{tpu_custom_call.1} parent=1 // pred_region
      %69 = dma.done [#allocation7], 4096
    $region37: #{tpu_custom_call.1} parent=1 // pred_fallthru
      _
    // Predicated region
    $region38: #{tpu_custom_call.1} parent=1 // pred_check
      _
    $region39: #{tpu_custom_call.1} parent=1 // pred_check_branch
      %71 = sbr.rel (0) target = $region41
    $region40: #{tpu_custom_call.1} parent=1 // pred_region
      %73 = dma.done [#allocation7], 4096
    $region41: #{tpu_custom_call.1} parent=1 // pred_fallthru
      _
    %v75 = vld [vmem:[%s0] sm:$0xff]
    %v76 = vld [vmem:[%s1] sm:$0xf]
    %78 = vset.pattern.permute.xlu0 0
    %79 = vperm.xlu0 %78, %v75
    %v80 = vpop.permute.xlu0 %79
    %v83 = vperm.slane %v76, 0
    %v84 = vperm.slane %v76, 1
    %v85 = vperm.slane %v76, 2
    %v86 = vperm.slane %v76, 3
    %v91 = vmul.f32 %v80, %v83
    %v92 = vmul.f32 %v80, %v84
    %v93 = vmul.f32 %v80, %v85
    %v94 = vmul.f32 %v80, %v86
    %v95 = vld [vmem:[%s3] sm:$0xf]
    %v97 = vperm.slane %v95, 0
    %v98 = vperm.slane %v95, 1
    %v99 = vperm.slane %v95, 2
    %v100 = vperm.slane %v95, 3
    %v105 = vadd.f32 %v91, %v97
    %v106 = vadd.f32 %v92, %v98
    %v107 = vadd.f32 %v93, %v99
    %v108 = vadd.f32 %v94, %v100
    %109 = vst [vmem:[#allocation2] sm:$0xff] %v105
    %110 = vst [vmem:[#allocation2 + $0x8] sm:$0xff] %v106
    %111 = vst [vmem:[#allocation2 + $0x10] sm:$0xff] %v107
    %112 = vst [vmem:[#allocation2 + $0x18] sm:$0xff] %v108
    %v113 = vld [vmem:[#allocation8] sm:$0xff]
    %v114 = vld [vmem:[#allocation8 + $0x8] sm:$0xff]
    %v115 = vld [vmem:[#allocation8 + $0x10] sm:$0xff]
    %v116 = vld [vmem:[#allocation8 + $0x18] sm:$0xff]
    %v117 = vld [vmem:[#allocation8 + $0x20] sm:$0xff]
    %v118 = vld [vmem:[#allocation8 + $0x28] sm:$0xff]
    %v119 = vld [vmem:[#allocation8 + $0x30] sm:$0xff]
    %v120 = vld [vmem:[#allocation8 + $0x38] sm:$0xff]
    %v121 = vld [vmem:[#allocation8 + $0x40] sm:$0xff]
    %v122 = vld [vmem:[#allocation8 + $0x48] sm:$0xff]
    %v123 = vld [vmem:[#allocation8 + $0x50] sm:$0xff]
    %v124 = vld [vmem:[#allocation8 + $0x58] sm:$0xff]
    %v125 = vld [vmem:[#allocation8 + $0x60] sm:$0xff]
    %v126 = vld [vmem:[#allocation8 + $0x68] sm:$0xff]
    %v127 = vld [vmem:[#allocation8 + $0x70] sm:$0xff]
    %v128 = vld [vmem:[#allocation8 + $0x78] sm:$0xff]
    %v129 = vld [vmem:[#allocation8 + $0x80] sm:$0xff]
    %v130 = vld [vmem:[#allocation8 + $0x88] sm:$0xff]
    %v131 = vld [vmem:[#allocation8 + $0x90] sm:$0xff]
    %v132 = vld [vmem:[#allocation8 + $0x98] sm:$0xff]
    %v133 = vld [vmem:[#allocation8 + $0xa0] sm:$0xff]
    %v134 = vld [vmem:[#allocation8 + $0xa8] sm:$0xff]
    %v135 = vld [vmem:[#allocation8 + $0xb0] sm:$0xff]
    %v136 = vld [vmem:[#allocation8 + $0xb8] sm:$0xff]
    %v137 = vld [vmem:[#allocation8 + $0xc0] sm:$0xff]
    %v138 = vld [vmem:[#allocation8 + $0xc8] sm:$0xff]
    %v139 = vld [vmem:[#allocation8 + $0xd0] sm:$0xff]
    %v140 = vld [vmem:[#allocation8 + $0xd8] sm:$0xff]
    %v141 = vld [vmem:[#allocation8 + $0xe0] sm:$0xff]
    %v142 = vld [vmem:[#allocation8 + $0xe8] sm:$0xff]
    %v143 = vld [vmem:[#allocation8 + $0xf0] sm:$0xff]
    %v144 = vld [vmem:[#allocation8 + $0xf8] sm:$0xff]
    %v145 = vld [vmem:[%s6] sm:$0xf]
    %v178 = vunpack.c.l.b16 %v113
    %v179 = vunpack.c.h.b16 %v113
    %v180 = vunpack.c.l.b16 %v114
    %v181 = vunpack.c.h.b16 %v114
    %v182 = vunpack.c.l.b16 %v115
    %v183 = vunpack.c.h.b16 %v115
    %v184 = vunpack.c.l.b16 %v116
    %v185 = vunpack.c.h.b16 %v116
    %v186 = vunpack.c.l.b16 %v117
    %v187 = vunpack.c.h.b16 %v117
    %v188 = vunpack.c.l.b16 %v118
    %v189 = vunpack.c.h.b16 %v118
    %v190 = vunpack.c.l.b16 %v119
    %v191 = vunpack.c.h.b16 %v119
    %v192 = vunpack.c.l.b16 %v120
    %v193 = vunpack.c.h.b16 %v120
    %v194 = vunpack.c.l.b16 %v121
    %v195 = vunpack.c.h.b16 %v121
    %v196 = vunpack.c.l.b16 %v122
    %v197 = vunpack.c.h.b16 %v122
    %v198 = vunpack.c.l.b16 %v123
    %v199 = vunpack.c.h.b16 %v123
    %v200 = vunpack.c.l.b16 %v124
    %v201 = vunpack.c.h.b16 %v124
    %v202 = vunpack.c.l.b16 %v125
    %v203 = vunpack.c.h.b16 %v125
    %v204 = vunpack.c.l.b16 %v126
    %v205 = vunpack.c.h.b16 %v126
    %v206 = vunpack.c.l.b16 %v127
    %v207 = vunpack.c.h.b16 %v127
    %v208 = vunpack.c.l.b16 %v128
    %v209 = vunpack.c.h.b16 %v128
    %v210 = vunpack.c.l.b16 %v129
    %v211 = vunpack.c.h.b16 %v129
    %v212 = vunpack.c.l.b16 %v130
    %v213 = vunpack.c.h.b16 %v130
    %v214 = vunpack.c.l.b16 %v131
    %v215 = vunpack.c.h.b16 %v131
    %v216 = vunpack.c.l.b16 %v132
    %v217 = vunpack.c.h.b16 %v132
    %v218 = vunpack.c.l.b16 %v133
    %v219 = vunpack.c.h.b16 %v133
    %v220 = vunpack.c.l.b16 %v134
    %v221 = vunpack.c.h.b16 %v134
    %v222 = vunpack.c.l.b16 %v135
    %v223 = vunpack.c.h.b16 %v135
    %v224 = vunpack.c.l.b16 %v136
    %v225 = vunpack.c.h.b16 %v136
    %v226 = vunpack.c.l.b16 %v137
    %v227 = vunpack.c.h.b16 %v137
    %v228 = vunpack.c.l.b16 %v138
    %v229 = vunpack.c.h.b16 %v138
    %v230 = vunpack.c.l.b16 %v139
    %v231 = vunpack.c.h.b16 %v139
    %v232 = vunpack.c.l.b16 %v140
    %v233 = vunpack.c.h.b16 %v140
    %v234 = vunpack.c.l.b16 %v141
    %v235 = vunpack.c.h.b16 %v141
    %v236 = vunpack.c.l.b16 %v142
    %v237 = vunpack.c.h.b16 %v142
    %v238 = vunpack.c.l.b16 %v143
    %v239 = vunpack.c.h.b16 %v143
    %v240 = vunpack.c.l.b16 %v144
    %v241 = vunpack.c.h.b16 %v144
    %v242 = vpack.c.b16 %v182, %v178
    %v243 = vpack.c.b16 %v183, %v179
    %v244 = vpack.c.b16 %v184, %v180
    %v245 = vpack.c.b16 %v185, %v181
    %v246 = vpack.c.b16 %v190, %v186
    %v247 = vpack.c.b16 %v191, %v187
    %v248 = vpack.c.b16 %v192, %v188
    %v249 = vpack.c.b16 %v193, %v189
    %v250 = vpack.c.b16 %v198, %v194
    %v251 = vpack.c.b16 %v199, %v195
    %v252 = vpack.c.b16 %v200, %v196
    %v253 = vpack.c.b16 %v201, %v197
    %v254 = vpack.c.b16 %v206, %v202
    %v255 = vpack.c.b16 %v207, %v203
    %v256 = vpack.c.b16 %v208, %v204
    %v257 = vpack.c.b16 %v209, %v205
    %v258 = vpack.c.b16 %v214, %v210
    %v259 = vpack.c.b16 %v215, %v211
    %v260 = vpack.c.b16 %v216, %v212
    %v261 = vpack.c.b16 %v217, %v213
    %v262 = vpack.c.b16 %v222, %v218
    %v263 = vpack.c.b16 %v223, %v219
    %v264 = vpack.c.b16 %v224, %v220
    %v265 = vpack.c.b16 %v225, %v221
    %v266 = vpack.c.b16 %v230, %v226
    %v267 = vpack.c.b16 %v231, %v227
    %v268 = vpack.c.b16 %v232, %v228
    %v269 = vpack.c.b16 %v233, %v229
    %v270 = vpack.c.b16 %v238, %v234
    %v271 = vpack.c.b16 %v239, %v235
    %v272 = vpack.c.b16 %v240, %v236
    %v273 = vpack.c.b16 %v241, %v237
    %v307 = vperm.slane %v145, 0
    %v308 = vperm.slane %v145, 1
    %v309 = vperm.slane %v145, 2
    %v310 = vperm.slane %v145, 3
    %315 = vmatpush.bf16.msra.mxu0 %v270
    %316 = vmatpush.bf16.msra.mxu0 %v266
    %317 = vmatpush.bf16.msra.mxu0 %v262
    %318 = vmatpush.bf16.msra.mxu0 %v258
    %319 = vmatpush.bf16.msra.mxu0 %v254
    %320 = vmatpush.bf16.msra.mxu0 %v250
    %321 = vmatpush.bf16.msra.mxu0 %v246
    %322 = vmatpush.bf16.msra.mxu0 %v242
    %323 = vmatmul.bf16.gmra.mxu0 0
    %v324 = vpop.f32.mrf.mxu0
    %v325 = vadd.f32 %v307, %v324
    %v326 = vpop.f32.mrf.mxu0
    %327 = vdwg.mxu0
    %328 = vmatpush.bf16.msra.mxu0 %v271
    %329 = vmatpush.bf16.msra.mxu0 %v267
    %330 = vmatpush.bf16.msra.mxu0 %v263
    %331 = vmatpush.bf16.msra.mxu0 %v259
    %332 = vmatpush.bf16.msra.mxu0 %v255
    %333 = vmatpush.bf16.msra.mxu0 %v251
    %334 = vmatpush.bf16.msra.mxu0 %v247
    %335 = vmatpush.bf16.msra.mxu0 %v243
    %336 = vmatmul.bf16.gmra.mxu0 0
    %v337 = vpop.f32.mrf.mxu0
    %v338 = vadd.f32 %v308, %v337
    %v339 = vpop.f32.mrf.mxu0
    %340 = vdwg.mxu0
    %341 = vmatpush.bf16.msra.mxu0 %v272
    %342 = vmatpush.bf16.msra.mxu0 %v268
    %343 = vmatpush.bf16.msra.mxu0 %v264
    %344 = vmatpush.bf16.msra.mxu0 %v260
    %345 = vmatpush.bf16.msra.mxu0 %v256
    %346 = vmatpush.bf16.msra.mxu0 %v252
    %347 = vmatpush.bf16.msra.mxu0 %v248
    %348 = vmatpush.bf16.msra.mxu0 %v244
    %349 = vmatmul.bf16.gmra.mxu0 0
    %v350 = vpop.f32.mrf.mxu0
    %v351 = vadd.f32 %v309, %v350
    %v352 = vpop.f32.mrf.mxu0
    %353 = vdwg.mxu0
    %354 = vmatpush.bf16.msra.mxu0 %v273
    %355 = vmatpush.bf16.msra.mxu0 %v269
    %356 = vmatpush.bf16.msra.mxu0 %v265
    %357 = vmatpush.bf16.msra.mxu0 %v261
    %358 = vmatpush.bf16.msra.mxu0 %v257
    %359 = vmatpush.bf16.msra.mxu0 %v253
    %360 = vmatpush.bf16.msra.mxu0 %v249
    %361 = vmatpush.bf16.msra.mxu0 %v245
    %362 = vmatmul.bf16.gmra.mxu0 0
    %v363 = vpop.f32.mrf.mxu0
    %v364 = vadd.f32 %v310, %v363
    %v365 = vpop.f32.mrf.mxu0
    %366 = vdwg.mxu0
    %s367 = smul.u32 0, 4
    %s368 = smul.addr %s367, 8
    %s369 = scalar_lea.vmem [#allocation2], %s368
    %v370 = vld [vmem:[%s369] ss:$8 sm:$0xf]
    %v371 = vld [vmem:[#allocation3] sm:$0xff]
    %v372 = vld [vmem:[#allocation3 + $0x8] sm:$0xff]
    %v373 = vld [vmem:[#allocation3 + $0x10] sm:$0xff]
    %v374 = vld [vmem:[#allocation3 + $0x18] sm:$0xff]
    %v375 = vld [vmem:[#allocation3 + $0x20] sm:$0xff]
    %v376 = vld [vmem:[#allocation3 + $0x28] sm:$0xff]
    %v377 = vld [vmem:[#allocation3 + $0x30] sm:$0xff]
    %v378 = vld [vmem:[#allocation3 + $0x38] sm:$0xff]
    %v379 = vld [vmem:[#allocation3 + $0x40] sm:$0xff]
    %v380 = vld [vmem:[#allocation3 + $0x48] sm:$0xff]
    %v381 = vld [vmem:[#allocation3 + $0x50] sm:$0xff]
    %v382 = vld [vmem:[#allocation3 + $0x58] sm:$0xff]
    %v383 = vld [vmem:[#allocation3 + $0x60] sm:$0xff]
    %v384 = vld [vmem:[#allocation3 + $0x68] sm:$0xff]
    %v385 = vld [vmem:[#allocation3 + $0x70] sm:$0xff]
    %v386 = vld [vmem:[#allocation3 + $0x78] sm:$0xff]
    %v387 = vld [vmem:[#allocation3 + $0x80] sm:$0xff]
    %v388 = vld [vmem:[#allocation3 + $0x88] sm:$0xff]
    %v389 = vld [vmem:[#allocation3 + $0x90] sm:$0xff]
    %v390 = vld [vmem:[#allocation3 + $0x98] sm:$0xff]
    %v391 = vld [vmem:[#allocation3 + $0xa0] sm:$0xff]
    %v392 = vld [vmem:[#allocation3 + $0xa8] sm:$0xff]
    %v393 = vld [vmem:[#allocation3 + $0xb0] sm:$0xff]
    %v394 = vld [vmem:[#allocation3 + $0xb8] sm:$0xff]
    %v395 = vld [vmem:[#allocation3 + $0xc0] sm:$0xff]
    %v396 = vld [vmem:[#allocation3 + $0xc8] sm:$0xff]
    %v397 = vld [vmem:[#allocation3 + $0xd0] sm:$0xff]
    %v398 = vld [vmem:[#allocation3 + $0xd8] sm:$0xff]
    %v399 = vld [vmem:[#allocation3 + $0xe0] sm:$0xff]
    %v400 = vld [vmem:[#allocation3 + $0xe8] sm:$0xff]
    %v401 = vld [vmem:[#allocation3 + $0xf0] sm:$0xff]
    %v402 = vld [vmem:[#allocation3 + $0xf8] sm:$0xff]
    %v435 = vunpack.c.l.b16 %v371
    %v436 = vunpack.c.h.b16 %v371
    %v437 = vunpack.c.l.b16 %v372
    %v438 = vunpack.c.h.b16 %v372
    %v439 = vunpack.c.l.b16 %v373
    %v440 = vunpack.c.h.b16 %v373
    %v441 = vunpack.c.l.b16 %v374
    %v442 = vunpack.c.h.b16 %v374
    %v443 = vunpack.c.l.b16 %v375
    %v444 = vunpack.c.h.b16 %v375
    %v445 = vunpack.c.l.b16 %v376
    %v446 = vunpack.c.h.b16 %v376
    %v447 = vunpack.c.l.b16 %v377
    %v448 = vunpack.c.h.b16 %v377
    %v449 = vunpack.c.l.b16 %v378
    %v450 = vunpack.c.h.b16 %v378
    %v451 = vunpack.c.l.b16 %v379
    %v452 = vunpack.c.h.b16 %v379
    %v453 = vunpack.c.l.b16 %v380
    %v454 = vunpack.c.h.b16 %v380
    %v455 = vunpack.c.l.b16 %v381
    %v456 = vunpack.c.h.b16 %v381
    %v457 = vunpack.c.l.b16 %v382
    %v458 = vunpack.c.h.b16 %v382
    %v459 = vunpack.c.l.b16 %v383
    %v460 = vunpack.c.h.b16 %v383
    %v461 = vunpack.c.l.b16 %v384
    %v462 = vunpack.c.h.b16 %v384
    %v463 = vunpack.c.l.b16 %v385
    %v464 = vunpack.c.h.b16 %v385
    %v465 = vunpack.c.l.b16 %v386
    %v466 = vunpack.c.h.b16 %v386
    %v467 = vunpack.c.l.b16 %v387
    %v468 = vunpack.c.h.b16 %v387
    %v469 = vunpack.c.l.b16 %v388
    %v470 = vunpack.c.h.b16 %v388
    %v471 = vunpack.c.l.b16 %v389
    %v472 = vunpack.c.h.b16 %v389
    %v473 = vunpack.c.l.b16 %v390
    %v474 = vunpack.c.h.b16 %v390
    %v475 = vunpack.c.l.b16 %v391
    %v476 = vunpack.c.h.b16 %v391
    %v477 = vunpack.c.l.b16 %v392
    %v478 = vunpack.c.h.b16 %v392
    %v479 = vunpack.c.l.b16 %v393
    %v480 = vunpack.c.h.b16 %v393
    %v481 = vunpack.c.l.b16 %v394
    %v482 = vunpack.c.h.b16 %v394
    %v483 = vunpack.c.l.b16 %v395
    %v484 = vunpack.c.h.b16 %v395
    %v485 = vunpack.c.l.b16 %v396
    %v486 = vunpack.c.h.b16 %v396
    %v487 = vunpack.c.l.b16 %v397
    %v488 = vunpack.c.h.b16 %v397
    %v489 = vunpack.c.l.b16 %v398
    %v490 = vunpack.c.h.b16 %v398
    %v491 = vunpack.c.l.b16 %v399
    %v492 = vunpack.c.h.b16 %v399
    %v493 = vunpack.c.l.b16 %v400
    %v494 = vunpack.c.h.b16 %v400
    %v495 = vunpack.c.l.b16 %v401
    %v496 = vunpack.c.h.b16 %v401
    %v497 = vunpack.c.l.b16 %v402
    %v498 = vunpack.c.h.b16 %v402
    %v499 = vpack.c.b16 %v439, %v435
    %v500 = vpack.c.b16 %v440, %v436
    %v501 = vpack.c.b16 %v441, %v437
    %v502 = vpack.c.b16 %v442, %v438
    %v503 = vpack.c.b16 %v447, %v443
    %v504 = vpack.c.b16 %v448, %v444
    %v505 = vpack.c.b16 %v449, %v445
    %v506 = vpack.c.b16 %v450, %v446
    %v507 = vpack.c.b16 %v455, %v451
    %v508 = vpack.c.b16 %v456, %v452
    %v509 = vpack.c.b16 %v457, %v453
    %v510 = vpack.c.b16 %v458, %v454
    %v511 = vpack.c.b16 %v463, %v459
    %v512 = vpack.c.b16 %v464, %v460
    %v513 = vpack.c.b16 %v465, %v461
    %v514 = vpack.c.b16 %v466, %v462
    %v515 = vpack.c.b16 %v471, %v467
    %v516 = vpack.c.b16 %v472, %v468
    %v517 = vpack.c.b16 %v473, %v469
    %v518 = vpack.c.b16 %v474, %v470
    %v519 = vpack.c.b16 %v479, %v475
    %v520 = vpack.c.b16 %v480, %v476
    %v521 = vpack.c.b16 %v481, %v477
    %v522 = vpack.c.b16 %v482, %v478
    %v523 = vpack.c.b16 %v487, %v483
    %v524 = vpack.c.b16 %v488, %v484
    %v525 = vpack.c.b16 %v489, %v485
    %v526 = vpack.c.b16 %v490, %v486
    %v527 = vpack.c.b16 %v495, %v491
    %v528 = vpack.c.b16 %v496, %v492
    %v529 = vpack.c.b16 %v497, %v493
    %v530 = vpack.c.b16 %v498, %v494
    %563 = vmatpush.bf16.msra.mxu0 %v527
    %564 = vmatpush.bf16.msra.mxu0 %v523
    %565 = vmatpush.bf16.msra.mxu0 %v519
    %566 = vmatpush.bf16.msra.mxu0 %v515
    %567 = vmatpush.bf16.msra.mxu0 %v511
    %568 = vmatpush.bf16.msra.mxu0 %v507
    %569 = vmatpush.bf16.msra.mxu0 %v503
    %570 = vmatpush.bf16.msra.mxu0 %v499
    %571 = vmatmul.bf16.gmra.mxu0 0
    %v572 = vpop.f32.mrf.mxu0
    %v573 = vadd.f32 0.0, %v572
    %v574 = vpop.f32.mrf.mxu0
    %575 = vdwg.mxu0
    %576 = vmatpush.bf16.msra.mxu0 %v528
    %577 = vmatpush.bf16.msra.mxu0 %v524
    %578 = vmatpush.bf16.msra.mxu0 %v520
    %579 = vmatpush.bf16.msra.mxu0 %v516
    %580 = vmatpush.bf16.msra.mxu0 %v512
    %581 = vmatpush.bf16.msra.mxu0 %v508
    %582 = vmatpush.bf16.msra.mxu0 %v504
    %583 = vmatpush.bf16.msra.mxu0 %v500
    %584 = vmatmul.bf16.gmra.mxu0 0
    %v585 = vpop.f32.mrf.mxu0
    %v586 = vadd.f32 0.0, %v585
    %v587 = vpop.f32.mrf.mxu0
    %588 = vdwg.mxu0
    %589 = vmatpush.bf16.msra.mxu0 %v529
    %590 = vmatpush.bf16.msra.mxu0 %v525
    %591 = vmatpush.bf16.msra.mxu0 %v521
    %592 = vmatpush.bf16.msra.mxu0 %v517
    %593 = vmatpush.bf16.msra.mxu0 %v513
    %594 = vmatpush.bf16.msra.mxu0 %v509
    %595 = vmatpush.bf16.msra.mxu0 %v505
    %596 = vmatpush.bf16.msra.mxu0 %v501
    %597 = vmatmul.bf16.gmra.mxu0 0
    %v598 = vpop.f32.mrf.mxu0
    %v599 = vadd.f32 0.0, %v598
    %v600 = vpop.f32.mrf.mxu0
    %601 = vdwg.mxu0
    %602 = vmatpush.bf16.msra.mxu0 %v530
    %603 = vmatpush.bf16.msra.mxu0 %v526
    %604 = vmatpush.bf16.msra.mxu0 %v522
    %605 = vmatpush.bf16.msra.mxu0 %v518
    %606 = vmatpush.bf16.msra.mxu0 %v514
    %607 = vmatpush.bf16.msra.mxu0 %v510
    %608 = vmatpush.bf16.msra.mxu0 %v506
    %609 = vmatpush.bf16.msra.mxu0 %v502
    %610 = vmatmul.bf16.gmra.mxu0 0
    %v611 = vpop.f32.mrf.mxu0
    %v612 = vadd.f32 0.0, %v611
    %v613 = vpop.f32.mrf.mxu0
    %614 = vdwg.mxu0
    %v619 = vrot.slane %v586, 7
    %v620 = vrot.slane %v599, 6
    %v621 = vrot.slane %v612, 5
    %vm622 = vcmask 1040384
    %v623 = vsel %vm622, %v573, %v619
    %vm624 = vcmask 1042434
    %v625 = vsel %vm624, %v620, %v621
    %vm626 = vcmask 1041408
    %v627 = vsel %vm626, %v623, %v625
    %v629 = vadd.f32 %v370, %v627
    %v630 = vtanh.pop %v629
    %v631 = vmul.f32 %v630, 0.5
    %v632 = vadd.f32 %v631, 0.5
    %v634 = vrot.slane %v632, 1
    %v636 = vmul.f32 %v634, 0.0
    %v638 = vrot.slane %v630, 2
    %v640 = vmul.f32 %v632, %v638
    %v641 = vadd.f32 %v636, %v640
    %v642 = vtanh.pop %v641
    %v643 = vrot.slane %v632, 3
    %v645 = vmul.f32 %v643, %v642
    %v646 = vpack.c.bf16 %v645, %v645
    %v647 = vld [vmem:[#allocation6] sm:$0xff]
    %v648 = vld [vmem:[#allocation6 + $0x8] sm:$0xff]
    %v649 = vld [vmem:[#allocation6 + $0x10] sm:$0xff]
    %v650 = vld [vmem:[#allocation6 + $0x18] sm:$0xff]
    %v651 = vld [vmem:[#allocation6 + $0x20] sm:$0xff]
    %v652 = vld [vmem:[#allocation6 + $0x28] sm:$0xff]
    %v653 = vld [vmem:[#allocation6 + $0x30] sm:$0xff]
    %v654 = vld [vmem:[#allocation6 + $0x38] sm:$0xff]
    %v655 = vld [vmem:[#allocation6 + $0x40] sm:$0xff]
    %v656 = vld [vmem:[#allocation6 + $0x48] sm:$0xff]
    %v657 = vld [vmem:[#allocation6 + $0x50] sm:$0xff]
    %v658 = vld [vmem:[#allocation6 + $0x58] sm:$0xff]
    %v659 = vld [vmem:[#allocation6 + $0x60] sm:$0xff]
    %v660 = vld [vmem:[#allocation6 + $0x68] sm:$0xff]
    %v661 = vld [vmem:[#allocation6 + $0x70] sm:$0xff]
    %v662 = vld [vmem:[#allocation6 + $0x78] sm:$0xff]
    %v663 = vld [vmem:[#allocation6 + $0x80] sm:$0xff]
    %v664 = vld [vmem:[#allocation6 + $0x88] sm:$0xff]
    %v665 = vld [vmem:[#allocation6 + $0x90] sm:$0xff]
    %v666 = vld [vmem:[#allocation6 + $0x98] sm:$0xff]
    %v667 = vld [vmem:[#allocation6 + $0xa0] sm:$0xff]
    %v668 = vld [vmem:[#allocation6 + $0xa8] sm:$0xff]
    %v669 = vld [vmem:[#allocation6 + $0xb0] sm:$0xff]
    %v670 = vld [vmem:[#allocation6 + $0xb8] sm:$0xff]
    %v671 = vld [vmem:[#allocation6 + $0xc0] sm:$0xff]
    %v672 = vld [vmem:[#allocation6 + $0xc8] sm:$0xff]
    %v673 = vld [vmem:[#allocation6 + $0xd0] sm:$0xff]
    %v674 = vld [vmem:[#allocation6 + $0xd8] sm:$0xff]
    %v675 = vld [vmem:[#allocation6 + $0xe0] sm:$0xff]
    %v676 = vld [vmem:[#allocation6 + $0xe8] sm:$0xff]
    %v677 = vld [vmem:[#allocation6 + $0xf0] sm:$0xff]
    %v678 = vld [vmem:[#allocation6 + $0xf8] sm:$0xff]
    %v711 = vunpack.c.l.b16 %v647
    %v712 = vunpack.c.h.b16 %v647
    %v713 = vunpack.c.l.b16 %v648
    %v714 = vunpack.c.h.b16 %v648
    %v715 = vunpack.c.l.b16 %v649
    %v716 = vunpack.c.h.b16 %v649
    %v717 = vunpack.c.l.b16 %v650
    %v718 = vunpack.c.h.b16 %v650
    %v719 = vunpack.c.l.b16 %v651
    %v720 = vunpack.c.h.b16 %v651
    %v721 = vunpack.c.l.b16 %v652
    %v722 = vunpack.c.h.b16 %v652
    %v723 = vunpack.c.l.b16 %v653
    %v724 = vunpack.c.h.b16 %v653
    %v725 = vunpack.c.l.b16 %v654
    %v726 = vunpack.c.h.b16 %v654
    %v727 = vunpack.c.l.b16 %v655
    %v728 = vunpack.c.h.b16 %v655
    %v729 = vunpack.c.l.b16 %v656
    %v730 = vunpack.c.h.b16 %v656
    %v731 = vunpack.c.l.b16 %v657
    %v732 = vunpack.c.h.b16 %v657
    %v733 = vunpack.c.l.b16 %v658
    %v734 = vunpack.c.h.b16 %v658
    %v735 = vunpack.c.l.b16 %v659
    %v736 = vunpack.c.h.b16 %v659
    %v737 = vunpack.c.l.b16 %v660
    %v738 = vunpack.c.h.b16 %v660
    %v739 = vunpack.c.l.b16 %v661
    %v740 = vunpack.c.h.b16 %v661
    %v741 = vunpack.c.l.b16 %v662
    %v742 = vunpack.c.h.b16 %v662
    %v743 = vunpack.c.l.b16 %v663
    %v744 = vunpack.c.h.b16 %v663
    %v745 = vunpack.c.l.b16 %v664
    %v746 = vunpack.c.h.b16 %v664
    %v747 = vunpack.c.l.b16 %v665
    %v748 = vunpack.c.h.b16 %v665
    %v749 = vunpack.c.l.b16 %v666
    %v750 = vunpack.c.h.b16 %v666
    %v751 = vunpack.c.l.b16 %v667
    %v752 = vunpack.c.h.b16 %v667
    %v753 = vunpack.c.l.b16 %v668
    %v754 = vunpack.c.h.b16 %v668
    %v755 = vunpack.c.l.b16 %v669
    %v756 = vunpack.c.h.b16 %v669
    %v757 = vunpack.c.l.b16 %v670
    %v758 = vunpack.c.h.b16 %v670
    %v759 = vunpack.c.l.b16 %v671
    %v760 = vunpack.c.h.b16 %v671
    %v761 = vunpack.c.l.b16 %v672
    %v762 = vunpack.c.h.b16 %v672
    %v763 = vunpack.c.l.b16 %v673
    %v764 = vunpack.c.h.b16 %v673
    %v765 = vunpack.c.l.b16 %v674
    %v766 = vunpack.c.h.b16 %v674
    %v767 = vunpack.c.l.b16 %v675
    %v768 = vunpack.c.h.b16 %v675
    %v769 = vunpack.c.l.b16 %v676
    %v770 = vunpack.c.h.b16 %v676
    %v771 = vunpack.c.l.b16 %v677
    %v772 = vunpack.c.h.b16 %v677
    %v773 = vunpack.c.l.b16 %v678
    %v774 = vunpack.c.h.b16 %v678
    %v775 = vpack.c.b16 %v715, %v711
    %v776 = vpack.c.b16 %v716, %v712
    %v777 = vpack.c.b16 %v717, %v713
    %v778 = vpack.c.b16 %v718, %v714
    %v779 = vpack.c.b16 %v723, %v719
    %v780 = vpack.c.b16 %v724, %v720
    %v781 = vpack.c.b16 %v725, %v721
    %v782 = vpack.c.b16 %v726, %v722
    %v783 = vpack.c.b16 %v731, %v727
    %v784 = vpack.c.b16 %v732, %v728
    %v785 = vpack.c.b16 %v733, %v729
    %v786 = vpack.c.b16 %v734, %v730
    %v787 = vpack.c.b16 %v739, %v735
    %v788 = vpack.c.b16 %v740, %v736
    %v789 = vpack.c.b16 %v741, %v737
    %v790 = vpack.c.b16 %v742, %v738
    %v791 = vpack.c.b16 %v747, %v743
    %v792 = vpack.c.b16 %v748, %v744
    %v793 = vpack.c.b16 %v749, %v745
    %v794 = vpack.c.b16 %v750, %v746
    %v795 = vpack.c.b16 %v755, %v751
    %v796 = vpack.c.b16 %v756, %v752
    %v797 = vpack.c.b16 %v757, %v753
    %v798 = vpack.c.b16 %v758, %v754
    %v799 = vpack.c.b16 %v763, %v759
    %v800 = vpack.c.b16 %v764, %v760
    %v801 = vpack.c.b16 %v765, %v761
    %v802 = vpack.c.b16 %v766, %v762
    %v803 = vpack.c.b16 %v771, %v767
    %v804 = vpack.c.b16 %v772, %v768
    %v805 = vpack.c.b16 %v773, %v769
    %v806 = vpack.c.b16 %v774, %v770
    %839 = vmatpush.bf16.msra.mxu0 %v803
    %840 = vmatpush.bf16.msra.mxu0 %v799
    %841 = vmatpush.bf16.msra.mxu0 %v795
    %842 = vmatpush.bf16.msra.mxu0 %v791
    %843 = vmatpush.bf16.msra.mxu0 %v787
    %844 = vmatpush.bf16.msra.mxu0 %v783
    %845 = vmatpush.bf16.msra.mxu0 %v779
    %846 = vmatpush.bf16.msra.mxu0 %v775
    %847 = vmatmul.bf16.gmra.mxu0 %v646
    %v848 = vpop.f32.mrf.mxu0
    %v849 = vadd.f32 0.0, %v848
    %v850 = vpop.f32.mrf.mxu0
    %851 = vdwg.mxu0
    %852 = vmatpush.bf16.msra.mxu0 %v804
    %853 = vmatpush.bf16.msra.mxu0 %v800
    %854 = vmatpush.bf16.msra.mxu0 %v796
    %855 = vmatpush.bf16.msra.mxu0 %v792
    %856 = vmatpush.bf16.msra.mxu0 %v788
    %857 = vmatpush.bf16.msra.mxu0 %v784
    %858 = vmatpush.bf16.msra.mxu0 %v780
    %859 = vmatpush.bf16.msra.mxu0 %v776
    %860 = vmatmul.bf16.gmra.mxu0 %v646
    %v861 = vpop.f32.mrf.mxu0
    %v862 = vadd.f32 0.0, %v861
    %v863 = vpop.f32.mrf.mxu0
    %864 = vdwg.mxu0
    %865 = vmatpush.bf16.msra.mxu0 %v805
    %866 = vmatpush.bf16.msra.mxu0 %v801
    %867 = vmatpush.bf16.msra.mxu0 %v797
    %868 = vmatpush.bf16.msra.mxu0 %v793
    %869 = vmatpush.bf16.msra.mxu0 %v789
    %870 = vmatpush.bf16.msra.mxu0 %v785
    %871 = vmatpush.bf16.msra.mxu0 %v781
    %872 = vmatpush.bf16.msra.mxu0 %v777
    %873 = vmatmul.bf16.gmra.mxu0 %v646
    %v874 = vpop.f32.mrf.mxu0
    %v875 = vadd.f32 0.0, %v874
    %v876 = vpop.f32.mrf.mxu0
    %877 = vdwg.mxu0
    %878 = vmatpush.bf16.msra.mxu0 %v806
    %879 = vmatpush.bf16.msra.mxu0 %v802
    %880 = vmatpush.bf16.msra.mxu0 %v798
    %881 = vmatpush.bf16.msra.mxu0 %v794
    %882 = vmatpush.bf16.msra.mxu0 %v790
    %883 = vmatpush.bf16.msra.mxu0 %v786
    %884 = vmatpush.bf16.msra.mxu0 %v782
    %885 = vmatpush.bf16.msra.mxu0 %v778
    %886 = vmatmul.bf16.gmra.mxu0 %v646
    %v887 = vpop.f32.mrf.mxu0
    %v888 = vadd.f32 0.0, %v887
    %v889 = vpop.f32.mrf.mxu0
    %890 = vdwg.mxu0
    %v891 = vadd.f32 %v325, %v849
    %v892 = vadd.f32 %v338, %v862
    %v893 = vadd.f32 %v351, %v875
    %v894 = vadd.f32 %v364, %v888
    %v895 = vtanh.pop %v891
    %v896 = vtanh.pop %v892
    %v897 = vtanh.pop %v893
    %v898 = vtanh.pop %v894
    %v899 = vmul.f32 %v895, 0.5
    %v900 = vmul.f32 %v896, 0.5
    %v901 = vmul.f32 %v898, 0.5
    %v902 = vadd.f32 %v899, 0.5
    %v903 = vadd.f32 %v900, 0.5
    %v904 = vadd.f32 %v901, 0.5
    %v905 = vmul.f32 %v903, 0.0
    %v906 = vmul.f32 %v902, %v897
    %v907 = vadd.f32 %v905, %v906
    %v908 = vtanh.pop %v907
    %v909 = vmul.f32 %v904, %v908
    %v910 = vpack.c.bf16 %v909, %v909
    %911 = vmatpush.bf16.msra.mxu0 %v270
    %912 = vmatpush.bf16.msra.mxu0 %v266
    %913 = vmatpush.bf16.msra.mxu0 %v262
    %914 = vmatpush.bf16.msra.mxu0 %v258
    %915 = vmatpush.bf16.msra.mxu0 %v254
    %916 = vmatpush.bf16.msra.mxu0 %v250
    %917 = vmatpush.bf16.msra.mxu0 %v246
    %918 = vmatpush.bf16.msra.mxu0 %v242
    %919 = vmatmul.bf16.gmra.mxu0 %v910
    %v920 = vpop.f32.mrf.mxu0
    %v921 = vadd.f32 %v307, %v920
    %v922 = vpop.f32.mrf.mxu0
    %923 = vdwg.mxu0
    %924 = vmatpush.bf16.msra.mxu0 %v271
    %925 = vmatpush.bf16.msra.mxu0 %v267
    %926 = vmatpush.bf16.msra.mxu0 %v263
    %927 = vmatpush.bf16.msra.mxu0 %v259
    %928 = vmatpush.bf16.msra.mxu0 %v255
    %929 = vmatpush.bf16.msra.mxu0 %v251
    %930 = vmatpush.bf16.msra.mxu0 %v247
    %931 = vmatpush.bf16.msra.mxu0 %v243
    %932 = vmatmul.bf16.gmra.mxu0 %v910
    %v933 = vpop.f32.mrf.mxu0
    %v934 = vadd.f32 %v308, %v933
    %v935 = vpop.f32.mrf.mxu0
    %936 = vdwg.mxu0
    %937 = vmatpush.bf16.msra.mxu0 %v272
    %938 = vmatpush.bf16.msra.mxu0 %v268
    %939 = vmatpush.bf16.msra.mxu0 %v264
    %940 = vmatpush.bf16.msra.mxu0 %v260
    %941 = vmatpush.bf16.msra.mxu0 %v256
    %942 = vmatpush.bf16.msra.mxu0 %v252
    %943 = vmatpush.bf16.msra.mxu0 %v248
    %944 = vmatpush.bf16.msra.mxu0 %v244
    %945 = vmatmul.bf16.gmra.mxu0 %v910
    %v946 = vpop.f32.mrf.mxu0
    %v947 = vadd.f32 %v309, %v946
    %v948 = vpop.f32.mrf.mxu0
    %949 = vdwg.mxu0
    %950 = vmatpush.bf16.msra.mxu0 %v273
    %951 = vmatpush.bf16.msra.mxu0 %v269
    %952 = vmatpush.bf16.msra.mxu0 %v265
    %953 = vmatpush.bf16.msra.mxu0 %v261
    %954 = vmatpush.bf16.msra.mxu0 %v257
    %955 = vmatpush.bf16.msra.mxu0 %v253
    %956 = vmatpush.bf16.msra.mxu0 %v249
    %957 = vmatpush.bf16.msra.mxu0 %v245
    %958 = vmatmul.bf16.gmra.mxu0 %v910
    %v959 = vpop.f32.mrf.mxu0
    %v960 = vadd.f32 %v310, %v959
    %v961 = vpop.f32.mrf.mxu0
    %962 = vdwg.mxu0
    %s963 = sadd.s32 0, 1
    %s964 = sshra.s32 %s963, 3
    %s965 = sand.u32 %s963, 7
    %s966 = sshra.s32 %s963, 3
    %s967 = sand.u32 %s963, 7
    %s968 = smul.u32 %s964, 4
    %s969 = smul.u32 %s968, 8
    %s970 = sadd.s32 %s969, %s967
    %s971 = scalar_lea.vmem [#allocation2], %s970
    %v972 = vld [vmem:[%s971] ss:$8 sm:$0xf]
    %973 = vmatpush.bf16.msra.mxu0 %v527
    %974 = vmatpush.bf16.msra.mxu0 %v523
    %975 = vmatpush.bf16.msra.mxu0 %v519
    %976 = vmatpush.bf16.msra.mxu0 %v515
    %977 = vmatpush.bf16.msra.mxu0 %v511
    %978 = vmatpush.bf16.msra.mxu0 %v507
    %979 = vmatpush.bf16.msra.mxu0 %v503
    %980 = vmatpush.bf16.msra.mxu0 %v499
    %981 = vmatmul.bf16.gmra.mxu0 %v646
    %v982 = vpop.f32.mrf.mxu0
    %v983 = vadd.f32 0.0, %v982
    %v984 = vpop.f32.mrf.mxu0
    %985 = vdwg.mxu0
    %986 = vmatpush.bf16.msra.mxu0 %v528
    %987 = vmatpush.bf16.msra.mxu0 %v524
    %988 = vmatpush.bf16.msra.mxu0 %v520
    %989 = vmatpush.bf16.msra.mxu0 %v516
    %990 = vmatpush.bf16.msra.mxu0 %v512
    %991 = vmatpush.bf16.msra.mxu0 %v508
    %992 = vmatpush.bf16.msra.mxu0 %v504
    %993 = vmatpush.bf16.msra.mxu0 %v500
    %994 = vmatmul.bf16.gmra.mxu0 %v646
    %v995 = vpop.f32.mrf.mxu0
    %v996 = vadd.f32 0.0, %v995
    %v997 = vpop.f32.mrf.mxu0
    %998 = vdwg.mxu0
    %999 = vmatpush.bf16.msra.mxu0 %v529
    %1000 = vmatpush.bf16.msra.mxu0 %v525
    %1001 = vmatpush.bf16.msra.mxu0 %v521
    %1002 = vmatpush.bf16.msra.mxu0 %v517
    %1003 = vmatpush.bf16.msra.mxu0 %v513
    %1004 = vmatpush.bf16.msra.mxu0 %v509
    %1005 = vmatpush.bf16.msra.mxu0 %v505
    %1006 = vmatpush.bf16.msra.mxu0 %v501
    %1007 = vmatmul.bf16.gmra.mxu0 %v646
    %v1008 = vpop.f32.mrf.mxu0
    %v1009 = vadd.f32 0.0, %v1008
    %v1010 = vpop.f32.mrf.mxu0
    %1011 = vdwg.mxu0
    %1012 = vmatpush.bf16.msra.mxu0 %v530
    %1013 = vmatpush.bf16.msra.mxu0 %v526
    %1014 = vmatpush.bf16.msra.mxu0 %v522
    %1015 = vmatpush.bf16.msra.mxu0 %v518
    %1016 = vmatpush.bf16.msra.mxu0 %v514
    %1017 = vmatpush.bf16.msra.mxu0 %v510
    %1018 = vmatpush.bf16.msra.mxu0 %v506
    %1019 = vmatpush.bf16.msra.mxu0 %v502
    %1020 = vmatmul.bf16.gmra.mxu0 %v646
    %v1021 = vpop.f32.mrf.mxu0
    %v1022 = vadd.f32 0.0, %v1021
    %v1023 = vpop.f32.mrf.mxu0
    %1024 = vdwg.mxu0
    %v1029 = vrot.slane %v996, 7
    %v1030 = vrot.slane %v1009, 6
    %v1031 = vrot.slane %v1022, 5
    %v1032 = vsel %vm622, %v983, %v1029
    %v1033 = vsel %vm624, %v1030, %v1031
    %v1034 = vsel %vm626, %v1032, %v1033
    %v1036 = vadd.f32 %v972, %v1034
    %v1037 = vtanh.pop %v1036
    %v1038 = vmul.f32 %v1037, 0.5
    %v1039 = vadd.f32 %v1038, 0.5
    %v1041 = vrot.slane %v1039, 1
    %v1043 = vmul.f32 %v1041, %v641
    %v1045 = vrot.slane %v1037, 2
    %v1047 = vmul.f32 %v1039, %v1045
    %v1048 = vadd.f32 %v1043, %v1047
    %v1049 = vtanh.pop %v1048
    %v1050 = vrot.slane %v1039, 3
    %v1052 = vmul.f32 %v1050, %v1049
    %v1053 = vpack.c.bf16 %v1052, %v1052
    %1054 = vmatpush.bf16.msra.mxu0 %v803
    %1055 = vmatpush.bf16.msra.mxu0 %v799
    %1056 = vmatpush.bf16.msra.mxu0 %v795
    %1057 = vmatpush.bf16.msra.mxu0 %v791
    %1058 = vmatpush.bf16.msra.mxu0 %v787
    %1059 = vmatpush.bf16.msra.mxu0 %v783
    %1060 = vmatpush.bf16.msra.mxu0 %v779
    %1061 = vmatpush.bf16.msra.mxu0 %v775
    %1062 = vmatmul.bf16.gmra.mxu0 %v1053
    %v1063 = vpop.f32.mrf.mxu0
    %v1064 = vadd.f32 0.0, %v1063
    %v1065 = vpop.f32.mrf.mxu0
    %1066 = vdwg.mxu0
    %1067 = vmatpush.bf16.msra.mxu0 %v804
    %1068 = vmatpush.bf16.msra.mxu0 %v800
    %1069 = vmatpush.bf16.msra.mxu0 %v796
    %1070 = vmatpush.bf16.msra.mxu0 %v792
    %1071 = vmatpush.bf16.msra.mxu0 %v788
    %1072 = vmatpush.bf16.msra.mxu0 %v784
    %1073 = vmatpush.bf16.msra.mxu0 %v780
    %1074 = vmatpush.bf16.msra.mxu0 %v776
    %1075 = vmatmul.bf16.gmra.mxu0 %v1053
    %v1076 = vpop.f32.mrf.mxu0
    %v1077 = vadd.f32 0.0, %v1076
    %v1078 = vpop.f32.mrf.mxu0
    %1079 = vdwg.mxu0
    %1080 = vmatpush.bf16.msra.mxu0 %v805
    %1081 = vmatpush.bf16.msra.mxu0 %v801
    %1082 = vmatpush.bf16.msra.mxu0 %v797
    %1083 = vmatpush.bf16.msra.mxu0 %v793
    %1084 = vmatpush.bf16.msra.mxu0 %v789
    %1085 = vmatpush.bf16.msra.mxu0 %v785
    %1086 = vmatpush.bf16.msra.mxu0 %v781
    %1087 = vmatpush.bf16.msra.mxu0 %v777
    %1088 = vmatmul.bf16.gmra.mxu0 %v1053
    %v1089 = vpop.f32.mrf.mxu0
    %v1090 = vadd.f32 0.0, %v1089
    %v1091 = vpop.f32.mrf.mxu0
    %1092 = vdwg.mxu0
    %1093 = vmatpush.bf16.msra.mxu0 %v806
    %1094 = vmatpush.bf16.msra.mxu0 %v802
    %1095 = vmatpush.bf16.msra.mxu0 %v798
    %1096 = vmatpush.bf16.msra.mxu0 %v794
    %1097 = vmatpush.bf16.msra.mxu0 %v790
    %1098 = vmatpush.bf16.msra.mxu0 %v786
    %1099 = vmatpush.bf16.msra.mxu0 %v782
    %1100 = vmatpush.bf16.msra.mxu0 %v778
    %1101 = vmatmul.bf16.gmra.mxu0 %v1053
    %v1102 = vpop.f32.mrf.mxu0
    %v1103 = vadd.f32 0.0, %v1102
    %v1104 = vpop.f32.mrf.mxu0
    %1105 = vdwg.mxu0
    %v1106 = vadd.f32 %v921, %v1064
    %v1107 = vadd.f32 %v934, %v1077
    %v1108 = vadd.f32 %v947, %v1090
    %v1109 = vadd.f32 %v960, %v1103
    %v1110 = vtanh.pop %v1106
    %v1111 = vtanh.pop %v1107
    %v1112 = vtanh.pop %v1108
    %v1113 = vtanh.pop %v1109
    %v1114 = vmul.f32 %v1110, 0.5
    %v1115 = vmul.f32 %v1111, 0.5
    %v1116 = vmul.f32 %v1113, 0.5
    %v1117 = vadd.f32 %v1114, 0.5
    %v1118 = vadd.f32 %v1115, 0.5
    %v1119 = vadd.f32 %v1116, 0.5
    %v1120 = vmul.f32 %v1118, %v907
    %v1121 = vmul.f32 %v1117, %v1112
    %v1122 = vadd.f32 %v1120, %v1121
    %v1123 = vtanh.pop %v1122
    %v1124 = vmul.f32 %v1119, %v1123
    %v1125 = vpack.c.bf16 %v1124, %v1124
    %1126 = vmatpush.bf16.msra.mxu0 %v270
    %1127 = vmatpush.bf16.msra.mxu0 %v266
    %1128 = vmatpush.bf16.msra.mxu0 %v262
    %1129 = vmatpush.bf16.msra.mxu0 %v258
    %1130 = vmatpush.bf16.msra.mxu0 %v254
    %1131 = vmatpush.bf16.msra.mxu0 %v250
    %1132 = vmatpush.bf16.msra.mxu0 %v246
    %1133 = vmatpush.bf16.msra.mxu0 %v242
    %1134 = vmatmul.bf16.gmra.mxu0 %v1125
    %v1135 = vpop.f32.mrf.mxu0
    %v1136 = vadd.f32 %v307, %v1135
    %v1137 = vpop.f32.mrf.mxu0
    %1138 = vdwg.mxu0
    %1139 = vmatpush.bf16.msra.mxu0 %v271
    %1140 = vmatpush.bf16.msra.mxu0 %v267
    %1141 = vmatpush.bf16.msra.mxu0 %v263
    %1142 = vmatpush.bf16.msra.mxu0 %v259
    %1143 = vmatpush.bf16.msra.mxu0 %v255
    %1144 = vmatpush.bf16.msra.mxu0 %v251
    %1145 = vmatpush.bf16.msra.mxu0 %v247
    %1146 = vmatpush.bf16.msra.mxu0 %v243
    %1147 = vmatmul.bf16.gmra.mxu0 %v1125
    %v1148 = vpop.f32.mrf.mxu0
    %v1149 = vadd.f32 %v308, %v1148
    %v1150 = vpop.f32.mrf.mxu0
    %1151 = vdwg.mxu0
    %1152 = vmatpush.bf16.msra.mxu0 %v272
    %1153 = vmatpush.bf16.msra.mxu0 %v268
    %1154 = vmatpush.bf16.msra.mxu0 %v264
    %1155 = vmatpush.bf16.msra.mxu0 %v260
    %1156 = vmatpush.bf16.msra.mxu0 %v256
    %1157 = vmatpush.bf16.msra.mxu0 %v252
    %1158 = vmatpush.bf16.msra.mxu0 %v248
    %1159 = vmatpush.bf16.msra.mxu0 %v244
    %1160 = vmatmul.bf16.gmra.mxu0 %v1125
    %v1161 = vpop.f32.mrf.mxu0
    %v1162 = vadd.f32 %v309, %v1161
    %v1163 = vpop.f32.mrf.mxu0
    %1164 = vdwg.mxu0
    %1165 = vmatpush.bf16.msra.mxu0 %v273
    %1166 = vmatpush.bf16.msra.mxu0 %v269
    %1167 = vmatpush.bf16.msra.mxu0 %v265
    %1168 = vmatpush.bf16.msra.mxu0 %v261
    %1169 = vmatpush.bf16.msra.mxu0 %v257
    %1170 = vmatpush.bf16.msra.mxu0 %v253
    %1171 = vmatpush.bf16.msra.mxu0 %v249
    %1172 = vmatpush.bf16.msra.mxu0 %v245
    %1173 = vmatmul.bf16.gmra.mxu0 %v1125
    %v1174 = vpop.f32.mrf.mxu0
    %v1175 = vadd.f32 %v310, %v1174
    %v1176 = vpop.f32.mrf.mxu0
    %1177 = vdwg.mxu0
    %s1178 = sadd.s32 0, 2
    %s1179 = sshra.s32 %s1178, 3
    %s1180 = sand.u32 %s1178, 7
    %s1181 = sshra.s32 %s1178, 3
    %s1182 = sand.u32 %s1178, 7
    %s1183 = smul.u32 %s1179, 4
    %s1184 = smul.u32 %s1183, 8
    %s1185 = sadd.s32 %s1184, %s1182
    %s1186 = scalar_lea.vmem [#allocation2], %s1185
    %v1187 = vld [vmem:[%s1186] ss:$8 sm:$0xf]
    %1188 = vmatpush.bf16.msra.mxu0 %v527
    %1189 = vmatpush.bf16.msra.mxu0 %v523
    %1190 = vmatpush.bf16.msra.mxu0 %v519
    %1191 = vmatpush.bf16.msra.mxu0 %v515
    %1192 = vmatpush.bf16.msra.mxu0 %v511
    %1193 = vmatpush.bf16.msra.mxu0 %v507
    %1194 = vmatpush.bf16.msra.mxu0 %v503
    %1195 = vmatpush.bf16.msra.mxu0 %v499
    %1196 = vmatmul.bf16.gmra.mxu0 %v1053
    %v1197 = vpop.f32.mrf.mxu0
    %v1198 = vadd.f32 0.0, %v1197
    %v1199 = vpop.f32.mrf.mxu0
    %1200 = vdwg.mxu0
    %1201 = vmatpush.bf16.msra.mxu0 %v528
    %1202 = vmatpush.bf16.msra.mxu0 %v524
    %1203 = vmatpush.bf16.msra.mxu0 %v520
    %1204 = vmatpush.bf16.msra.mxu0 %v516
    %1205 = vmatpush.bf16.msra.mxu0 %v512
    %1206 = vmatpush.bf16.msra.mxu0 %v508
    %1207 = vmatpush.bf16.msra.mxu0 %v504
    %1208 = vmatpush.bf16.msra.mxu0 %v500
    %1209 = vmatmul.bf16.gmra.mxu0 %v1053
    %v1210 = vpop.f32.mrf.mxu0
    %v1211 = vadd.f32 0.0, %v1210
    %v1212 = vpop.f32.mrf.mxu0
    %1213 = vdwg.mxu0
    %1214 = vmatpush.bf16.msra.mxu0 %v529
    %1215 = vmatpush.bf16.msra.mxu0 %v525
    %1216 = vmatpush.bf16.msra.mxu0 %v521
    %1217 = vmatpush.bf16.msra.mxu0 %v517
    %1218 = vmatpush.bf16.msra.mxu0 %v513
    %1219 = vmatpush.bf16.msra.mxu0 %v509
    %1220 = vmatpush.bf16.msra.mxu0 %v505
    %1221 = vmatpush.bf16.msra.mxu0 %v501
    %1222 = vmatmul.bf16.gmra.mxu0 %v1053
    %v1223 = vpop.f32.mrf.mxu0
    %v1224 = vadd.f32 0.0, %v1223
    %v1225 = vpop.f32.mrf.mxu0
    %1226 = vdwg.mxu0
    %1227 = vmatpush.bf16.msra.mxu0 %v530
    %1228 = vmatpush.bf16.msra.mxu0 %v526
    %1229 = vmatpush.bf16.msra.mxu0 %v522
    %1230 = vmatpush.bf16.msra.mxu0 %v518
    %1231 = vmatpush.bf16.msra.mxu0 %v514
    %1232 = vmatpush.bf16.msra.mxu0 %v510
    %1233 = vmatpush.bf16.msra.mxu0 %v506
    %1234 = vmatpush.bf16.msra.mxu0 %v502
    %1235 = vmatmul.bf16.gmra.mxu0 %v1053
    %v1236 = vpop.f32.mrf.mxu0
    %v1237 = vadd.f32 0.0, %v1236
    %v1238 = vpop.f32.mrf.mxu0
    %1239 = vdwg.mxu0
    %v1244 = vrot.slane %v1211, 7
    %v1245 = vrot.slane %v1224, 6
    %v1246 = vrot.slane %v1237, 5
    %v1247 = vsel %vm622, %v1198, %v1244
    %v1248 = vsel %vm624, %v1245, %v1246
    %v1249 = vsel %vm626, %v1247, %v1248
    %v1251 = vadd.f32 %v1187, %v1249
    %v1252 = vtanh.pop %v1251
    %v1253 = vmul.f32 %v1252, 0.5
    %v1254 = vadd.f32 %v1253, 0.5
    %v1256 = vrot.slane %v1254, 1
    %v1258 = vmul.f32 %v1256, %v1048
    %v1260 = vrot.slane %v1252, 2
    %v1262 = vmul.f32 %v1254, %v1260
    %v1263 = vadd.f32 %v1258, %v1262
    %v1264 = vtanh.pop %v1263
    %v1265 = vrot.slane %v1254, 3
    %v1267 = vmul.f32 %v1265, %v1264
    %v1268 = vpack.c.bf16 %v1267, %v1267
    %1269 = vmatpush.bf16.msra.mxu0 %v803
    %1270 = vmatpush.bf16.msra.mxu0 %v799
    %1271 = vmatpush.bf16.msra.mxu0 %v795
    %1272 = vmatpush.bf16.msra.mxu0 %v791
    %1273 = vmatpush.bf16.msra.mxu0 %v787
    %1274 = vmatpush.bf16.msra.mxu0 %v783
    %1275 = vmatpush.bf16.msra.mxu0 %v779
    %1276 = vmatpush.bf16.msra.mxu0 %v775
    %1277 = vmatmul.bf16.gmra.mxu0 %v1268
    %v1278 = vpop.f32.mrf.mxu0
    %v1279 = vadd.f32 0.0, %v1278
    %v1280 = vpop.f32.mrf.mxu0
    %1281 = vdwg.mxu0
    %1282 = vmatpush.bf16.msra.mxu0 %v804
    %1283 = vmatpush.bf16.msra.mxu0 %v800
    %1284 = vmatpush.bf16.msra.mxu0 %v796
    %1285 = vmatpush.bf16.msra.mxu0 %v792
    %1286 = vmatpush.bf16.msra.mxu0 %v788
    %1287 = vmatpush.bf16.msra.mxu0 %v784
    %1288 = vmatpush.bf16.msra.mxu0 %v780
    %1289 = vmatpush.bf16.msra.mxu0 %v776
    %1290 = vmatmul.bf16.gmra.mxu0 %v1268
    %v1291 = vpop.f32.mrf.mxu0
    %v1292 = vadd.f32 0.0, %v1291
    %v1293 = vpop.f32.mrf.mxu0
    %1294 = vdwg.mxu0
    %1295 = vmatpush.bf16.msra.mxu0 %v805
    %1296 = vmatpush.bf16.msra.mxu0 %v801
    %1297 = vmatpush.bf16.msra.mxu0 %v797
    %1298 = vmatpush.bf16.msra.mxu0 %v793
    %1299 = vmatpush.bf16.msra.mxu0 %v789
    %1300 = vmatpush.bf16.msra.mxu0 %v785
    %1301 = vmatpush.bf16.msra.mxu0 %v781
    %1302 = vmatpush.bf16.msra.mxu0 %v777
    %1303 = vmatmul.bf16.gmra.mxu0 %v1268
    %v1304 = vpop.f32.mrf.mxu0
    %v1305 = vadd.f32 0.0, %v1304
    %v1306 = vpop.f32.mrf.mxu0
    %1307 = vdwg.mxu0
    %1308 = vmatpush.bf16.msra.mxu0 %v806
    %1309 = vmatpush.bf16.msra.mxu0 %v802
    %1310 = vmatpush.bf16.msra.mxu0 %v798
    %1311 = vmatpush.bf16.msra.mxu0 %v794
    %1312 = vmatpush.bf16.msra.mxu0 %v790
    %1313 = vmatpush.bf16.msra.mxu0 %v786
    %1314 = vmatpush.bf16.msra.mxu0 %v782
    %1315 = vmatpush.bf16.msra.mxu0 %v778
    %1316 = vmatmul.bf16.gmra.mxu0 %v1268
    %v1317 = vpop.f32.mrf.mxu0
    %v1318 = vadd.f32 0.0, %v1317
    %v1319 = vpop.f32.mrf.mxu0
    %1320 = vdwg.mxu0
    %v1321 = vadd.f32 %v1136, %v1279
    %v1322 = vadd.f32 %v1149, %v1292
    %v1323 = vadd.f32 %v1162, %v1305
    %v1324 = vadd.f32 %v1175, %v1318
    %v1325 = vtanh.pop %v1321
    %v1326 = vtanh.pop %v1322
    %v1327 = vtanh.pop %v1323
    %v1328 = vtanh.pop %v1324
    %v1329 = vmul.f32 %v1325, 0.5
    %v1330 = vmul.f32 %v1326, 0.5
    %v1331 = vmul.f32 %v1328, 0.5
    %v1332 = vadd.f32 %v1329, 0.5
    %v1333 = vadd.f32 %v1330, 0.5
    %v1334 = vadd.f32 %v1331, 0.5
    %v1335 = vmul.f32 %v1333, %v1122
    %v1336 = vmul.f32 %v1332, %v1327
    %v1337 = vadd.f32 %v1335, %v1336
    %v1338 = vtanh.pop %v1337
    %v1339 = vmul.f32 %v1334, %v1338
    %v1340 = vpack.c.bf16 %v1339, %v1339
    %1341 = vmatpush.bf16.msra.mxu0 %v270
    %1342 = vmatpush.bf16.msra.mxu0 %v266
    %1343 = vmatpush.bf16.msra.mxu0 %v262
    %1344 = vmatpush.bf16.msra.mxu0 %v258
    %1345 = vmatpush.bf16.msra.mxu0 %v254
    %1346 = vmatpush.bf16.msra.mxu0 %v250
    %1347 = vmatpush.bf16.msra.mxu0 %v246
    %1348 = vmatpush.bf16.msra.mxu0 %v242
    %1349 = vmatmul.bf16.gmra.mxu0 %v1340
    %v1350 = vpop.f32.mrf.mxu0
    %v1351 = vadd.f32 %v307, %v1350
    %v1352 = vpop.f32.mrf.mxu0
    %1353 = vdwg.mxu0
    %1354 = vmatpush.bf16.msra.mxu0 %v271
    %1355 = vmatpush.bf16.msra.mxu0 %v267
    %1356 = vmatpush.bf16.msra.mxu0 %v263
    %1357 = vmatpush.bf16.msra.mxu0 %v259
    %1358 = vmatpush.bf16.msra.mxu0 %v255
    %1359 = vmatpush.bf16.msra.mxu0 %v251
    %1360 = vmatpush.bf16.msra.mxu0 %v247
    %1361 = vmatpush.bf16.msra.mxu0 %v243
    %1362 = vmatmul.bf16.gmra.mxu0 %v1340
    %v1363 = vpop.f32.mrf.mxu0
    %v1364 = vadd.f32 %v308, %v1363
    %v1365 = vpop.f32.mrf.mxu0
    %1366 = vdwg.mxu0
    %1367 = vmatpush.bf16.msra.mxu0 %v272
    %1368 = vmatpush.bf16.msra.mxu0 %v268
    %1369 = vmatpush.bf16.msra.mxu0 %v264
    %1370 = vmatpush.bf16.msra.mxu0 %v260
    %1371 = vmatpush.bf16.msra.mxu0 %v256
    %1372 = vmatpush.bf16.msra.mxu0 %v252
    %1373 = vmatpush.bf16.msra.mxu0 %v248
    %1374 = vmatpush.bf16.msra.mxu0 %v244
    %1375 = vmatmul.bf16.gmra.mxu0 %v1340
    %v1376 = vpop.f32.mrf.mxu0
    %v1377 = vadd.f32 %v309, %v1376
    %v1378 = vpop.f32.mrf.mxu0
    %1379 = vdwg.mxu0
    %1380 = vmatpush.bf16.msra.mxu0 %v273
    %1381 = vmatpush.bf16.msra.mxu0 %v269
    %1382 = vmatpush.bf16.msra.mxu0 %v265
    %1383 = vmatpush.bf16.msra.mxu0 %v261
    %1384 = vmatpush.bf16.msra.mxu0 %v257
    %1385 = vmatpush.bf16.msra.mxu0 %v253
    %1386 = vmatpush.bf16.msra.mxu0 %v249
    %1387 = vmatpush.bf16.msra.mxu0 %v245
    %1388 = vmatmul.bf16.gmra.mxu0 %v1340
    %v1389 = vpop.f32.mrf.mxu0
    %v1390 = vadd.f32 %v310, %v1389
    %v1391 = vpop.f32.mrf.mxu0
    %1392 = vdwg.mxu0
    %s1393 = sadd.s32 0, 3
    %s1394 = sshra.s32 %s1393, 3
    %s1395 = sand.u32 %s1393, 7
    %s1396 = sshra.s32 %s1393, 3
    %s1397 = sand.u32 %s1393, 7
    %s1398 = smul.u32 %s1394, 4
    %s1399 = smul.u32 %s1398, 8
    %s1400 = sadd.s32 %s1399, %s1397
    %s1401 = scalar_lea.vmem [#allocation2], %s1400
    %v1402 = vld [vmem:[%s1401] ss:$8 sm:$0xf]
    %1403 = vmatpush.bf16.msra.mxu0 %v527
    %1404 = vmatpush.bf16.msra.mxu0 %v523
    %1405 = vmatpush.bf16.msra.mxu0 %v519
    %1406 = vmatpush.bf16.msra.mxu0 %v515
    %1407 = vmatpush.bf16.msra.mxu0 %v511
    %1408 = vmatpush.bf16.msra.mxu0 %v507
    %1409 = vmatpush.bf16.msra.mxu0 %v503
    %1410 = vmatpush.bf16.msra.mxu0 %v499
    %1411 = vmatmul.bf16.gmra.mxu0 %v1268
    %v1412 = vpop.f32.mrf.mxu0
    %v1413 = vadd.f32 0.0, %v1412
    %v1414 = vpop.f32.mrf.mxu0
    %1415 = vdwg.mxu0
    %1416 = vmatpush.bf16.msra.mxu0 %v528
    %1417 = vmatpush.bf16.msra.mxu0 %v524
    %1418 = vmatpush.bf16.msra.mxu0 %v520
    %1419 = vmatpush.bf16.msra.mxu0 %v516
    %1420 = vmatpush.bf16.msra.mxu0 %v512
    %1421 = vmatpush.bf16.msra.mxu0 %v508
    %1422 = vmatpush.bf16.msra.mxu0 %v504
    %1423 = vmatpush.bf16.msra.mxu0 %v500
    %1424 = vmatmul.bf16.gmra.mxu0 %v1268
    %v1425 = vpop.f32.mrf.mxu0
    %v1426 = vadd.f32 0.0, %v1425
    %v1427 = vpop.f32.mrf.mxu0
    %1428 = vdwg.mxu0
    %1429 = vmatpush.bf16.msra.mxu0 %v529
    %1430 = vmatpush.bf16.msra.mxu0 %v525
    %1431 = vmatpush.bf16.msra.mxu0 %v521
    %1432 = vmatpush.bf16.msra.mxu0 %v517
    %1433 = vmatpush.bf16.msra.mxu0 %v513
    %1434 = vmatpush.bf16.msra.mxu0 %v509
    %1435 = vmatpush.bf16.msra.mxu0 %v505
    %1436 = vmatpush.bf16.msra.mxu0 %v501
    %1437 = vmatmul.bf16.gmra.mxu0 %v1268
    %v1438 = vpop.f32.mrf.mxu0
    %v1439 = vadd.f32 0.0, %v1438
    %v1440 = vpop.f32.mrf.mxu0
    %1441 = vdwg.mxu0
    %1442 = vmatpush.bf16.msra.mxu0 %v530
    %1443 = vmatpush.bf16.msra.mxu0 %v526
    %1444 = vmatpush.bf16.msra.mxu0 %v522
    %1445 = vmatpush.bf16.msra.mxu0 %v518
    %1446 = vmatpush.bf16.msra.mxu0 %v514
    %1447 = vmatpush.bf16.msra.mxu0 %v510
    %1448 = vmatpush.bf16.msra.mxu0 %v506
    %1449 = vmatpush.bf16.msra.mxu0 %v502
    %1450 = vmatmul.bf16.gmra.mxu0 %v1268
    %v1451 = vpop.f32.mrf.mxu0
    %v1452 = vadd.f32 0.0, %v1451
    %v1453 = vpop.f32.mrf.mxu0
    %1454 = vdwg.mxu0
    %v1459 = vrot.slane %v1426, 7
    %v1460 = vrot.slane %v1439, 6
    %v1461 = vrot.slane %v1452, 5
    %v1462 = vsel %vm622, %v1413, %v1459
    %v1463 = vsel %vm624, %v1460, %v1461
    %v1464 = vsel %vm626, %v1462, %v1463
    %v1466 = vadd.f32 %v1402, %v1464
    %v1467 = vtanh.pop %v1466
    %v1468 = vmul.f32 %v1467, 0.5
    %v1469 = vadd.f32 %v1468, 0.5
    %v1471 = vrot.slane %v1469, 1
    %v1473 = vmul.f32 %v1471, %v1263
    %v1475 = vrot.slane %v1467, 2
    %v1477 = vmul.f32 %v1469, %v1475
    %v1478 = vadd.f32 %v1473, %v1477
    %v1479 = vtanh.pop %v1478
    %v1480 = vrot.slane %v1469, 3
    %v1482 = vmul.f32 %v1480, %v1479
    %v1483 = vpack.c.bf16 %v1482, %v1482
    %1484 = vmatpush.bf16.msra.mxu0 %v803
    %1485 = vmatpush.bf16.msra.mxu0 %v799
    %1486 = vmatpush.bf16.msra.mxu0 %v795
    %1487 = vmatpush.bf16.msra.mxu0 %v791
    %1488 = vmatpush.bf16.msra.mxu0 %v787
    %1489 = vmatpush.bf16.msra.mxu0 %v783
    %1490 = vmatpush.bf16.msra.mxu0 %v779
    %1491 = vmatpush.bf16.msra.mxu0 %v775
    %1492 = vmatmul.bf16.gmra.mxu0 %v1483
    %v1493 = vpop.f32.mrf.mxu0
    %v1494 = vadd.f32 0.0, %v1493
    %v1495 = vpop.f32.mrf.mxu0
    %1496 = vdwg.mxu0
    %1497 = vmatpush.bf16.msra.mxu0 %v804
    %1498 = vmatpush.bf16.msra.mxu0 %v800
    %1499 = vmatpush.bf16.msra.mxu0 %v796
    %1500 = vmatpush.bf16.msra.mxu0 %v792
    %1501 = vmatpush.bf16.msra.mxu0 %v788
    %1502 = vmatpush.bf16.msra.mxu0 %v784
    %1503 = vmatpush.bf16.msra.mxu0 %v780
    %1504 = vmatpush.bf16.msra.mxu0 %v776
    %1505 = vmatmul.bf16.gmra.mxu0 %v1483
    %v1506 = vpop.f32.mrf.mxu0
    %v1507 = vadd.f32 0.0, %v1506
    %v1508 = vpop.f32.mrf.mxu0
    %1509 = vdwg.mxu0
    %1510 = vmatpush.bf16.msra.mxu0 %v805
    %1511 = vmatpush.bf16.msra.mxu0 %v801
    %1512 = vmatpush.bf16.msra.mxu0 %v797
    %1513 = vmatpush.bf16.msra.mxu0 %v793
    %1514 = vmatpush.bf16.msra.mxu0 %v789
    %1515 = vmatpush.bf16.msra.mxu0 %v785
    %1516 = vmatpush.bf16.msra.mxu0 %v781
    %1517 = vmatpush.bf16.msra.mxu0 %v777
    %1518 = vmatmul.bf16.gmra.mxu0 %v1483
    %v1519 = vpop.f32.mrf.mxu0
    %v1520 = vadd.f32 0.0, %v1519
    %v1521 = vpop.f32.mrf.mxu0
    %1522 = vdwg.mxu0
    %1523 = vmatpush.bf16.msra.mxu0 %v806
    %1524 = vmatpush.bf16.msra.mxu0 %v802
    %1525 = vmatpush.bf16.msra.mxu0 %v798
    %1526 = vmatpush.bf16.msra.mxu0 %v794
    %1527 = vmatpush.bf16.msra.mxu0 %v790
    %1528 = vmatpush.bf16.msra.mxu0 %v786
    %1529 = vmatpush.bf16.msra.mxu0 %v782
    %1530 = vmatpush.bf16.msra.mxu0 %v778
    %1531 = vmatmul.bf16.gmra.mxu0 %v1483
    %v1532 = vpop.f32.mrf.mxu0
    %v1533 = vadd.f32 0.0, %v1532
    %v1534 = vpop.f32.mrf.mxu0
    %1535 = vdwg.mxu0
    %v1536 = vadd.f32 %v1351, %v1494
    %v1537 = vadd.f32 %v1364, %v1507
    %v1538 = vadd.f32 %v1377, %v1520
    %v1539 = vadd.f32 %v1390, %v1533
    %v1540 = vtanh.pop %v1536
    %v1541 = vtanh.pop %v1537
    %v1542 = vtanh.pop %v1538
    %v1543 = vtanh.pop %v1539
    %v1544 = vmul.f32 %v1540, 0.5
    %v1545 = vmul.f32 %v1541, 0.5
    %v1546 = vmul.f32 %v1543, 0.5
    %v1547 = vadd.f32 %v1544, 0.5
    %v1548 = vadd.f32 %v1545, 0.5
    %v1549 = vadd.f32 %v1546, 0.5
    %v1550 = vmul.f32 %v1548, %v1337
    %v1551 = vmul.f32 %v1547, %v1542
    %v1552 = vadd.f32 %v1550, %v1551
    %v1553 = vtanh.pop %v1552
    %v1554 = vmul.f32 %v1549, %v1553
    %v1555 = vpack.c.bf16 %v1554, %v1554
    %1556 = vmatpush.bf16.msra.mxu0 %v270
    %1557 = vmatpush.bf16.msra.mxu0 %v266
    %1558 = vmatpush.bf16.msra.mxu0 %v262
    %1559 = vmatpush.bf16.msra.mxu0 %v258
    %1560 = vmatpush.bf16.msra.mxu0 %v254
    %1561 = vmatpush.bf16.msra.mxu0 %v250
    %1562 = vmatpush.bf16.msra.mxu0 %v246
    %1563 = vmatpush.bf16.msra.mxu0 %v242
    %1564 = vmatmul.bf16.gmra.mxu0 %v1555
    %v1565 = vpop.f32.mrf.mxu0
    %v1566 = vadd.f32 %v307, %v1565
    %v1567 = vpop.f32.mrf.mxu0
    %1568 = vdwg.mxu0
    %1569 = vmatpush.bf16.msra.mxu0 %v271
    %1570 = vmatpush.bf16.msra.mxu0 %v267
    %1571 = vmatpush.bf16.msra.mxu0 %v263
    %1572 = vmatpush.bf16.msra.mxu0 %v259
    %1573 = vmatpush.bf16.msra.mxu0 %v255
    %1574 = vmatpush.bf16.msra.mxu0 %v251
    %1575 = vmatpush.bf16.msra.mxu0 %v247
    %1576 = vmatpush.bf16.msra.mxu0 %v243
    %1577 = vmatmul.bf16.gmra.mxu0 %v1555
    %v1578 = vpop.f32.mrf.mxu0
    %v1579 = vadd.f32 %v308, %v1578
    %v1580 = vpop.f32.mrf.mxu0
    %1581 = vdwg.mxu0
    %1582 = vmatpush.bf16.msra.mxu0 %v272
    %1583 = vmatpush.bf16.msra.mxu0 %v268
    %1584 = vmatpush.bf16.msra.mxu0 %v264
    %1585 = vmatpush.bf16.msra.mxu0 %v260
    %1586 = vmatpush.bf16.msra.mxu0 %v256
    %1587 = vmatpush.bf16.msra.mxu0 %v252
    %1588 = vmatpush.bf16.msra.mxu0 %v248
    %1589 = vmatpush.bf16.msra.mxu0 %v244
    %1590 = vmatmul.bf16.gmra.mxu0 %v1555
    %v1591 = vpop.f32.mrf.mxu0
    %v1592 = vadd.f32 %v309, %v1591
    %v1593 = vpop.f32.mrf.mxu0
    %1594 = vdwg.mxu0
    %1595 = vmatpush.bf16.msra.mxu0 %v273
    %1596 = vmatpush.bf16.msra.mxu0 %v269
    %1597 = vmatpush.bf16.msra.mxu0 %v265
    %1598 = vmatpush.bf16.msra.mxu0 %v261
    %1599 = vmatpush.bf16.msra.mxu0 %v257
    %1600 = vmatpush.bf16.msra.mxu0 %v253
    %1601 = vmatpush.bf16.msra.mxu0 %v249
    %1602 = vmatpush.bf16.msra.mxu0 %v245
    %1603 = vmatmul.bf16.gmra.mxu0 %v1555
    %v1604 = vpop.f32.mrf.mxu0
    %v1605 = vadd.f32 %v310, %v1604
    %v1606 = vpop.f32.mrf.mxu0
    %1607 = vdwg.mxu0
    %s1608 = sadd.s32 0, 4
    %s1609 = sshra.s32 %s1608, 3
    %s1610 = sand.u32 %s1608, 7
    %s1611 = sshra.s32 %s1608, 3
    %s1612 = sand.u32 %s1608, 7
    %s1613 = smul.u32 %s1609, 4
    %s1614 = smul.u32 %s1613, 8
    %s1615 = sadd.s32 %s1614, %s1612
    %s1616 = scalar_lea.vmem [#allocation2], %s1615
    %v1617 = vld [vmem:[%s1616] ss:$8 sm:$0xf]
    %1618 = vmatpush.bf16.msra.mxu0 %v527
    %1619 = vmatpush.bf16.msra.mxu0 %v523
    %1620 = vmatpush.bf16.msra.mxu0 %v519
    %1621 = vmatpush.bf16.msra.mxu0 %v515
    %1622 = vmatpush.bf16.msra.mxu0 %v511
    %1623 = vmatpush.bf16.msra.mxu0 %v507
    %1624 = vmatpush.bf16.msra.mxu0 %v503
    %1625 = vmatpush.bf16.msra.mxu0 %v499
    %1626 = vmatmul.bf16.gmra.mxu0 %v1483
    %v1627 = vpop.f32.mrf.mxu0
    %v1628 = vadd.f32 0.0, %v1627
    %v1629 = vpop.f32.mrf.mxu0
    %1630 = vdwg.mxu0
    %1631 = vmatpush.bf16.msra.mxu0 %v528
    %1632 = vmatpush.bf16.msra.mxu0 %v524
    %1633 = vmatpush.bf16.msra.mxu0 %v520
    %1634 = vmatpush.bf16.msra.mxu0 %v516
    %1635 = vmatpush.bf16.msra.mxu0 %v512
    %1636 = vmatpush.bf16.msra.mxu0 %v508
    %1637 = vmatpush.bf16.msra.mxu0 %v504
    %1638 = vmatpush.bf16.msra.mxu0 %v500
    %1639 = vmatmul.bf16.gmra.mxu0 %v1483
    %v1640 = vpop.f32.mrf.mxu0
    %v1641 = vadd.f32 0.0, %v1640
    %v1642 = vpop.f32.mrf.mxu0
    %1643 = vdwg.mxu0
    %1644 = vmatpush.bf16.msra.mxu0 %v529
    %1645 = vmatpush.bf16.msra.mxu0 %v525
    %1646 = vmatpush.bf16.msra.mxu0 %v521
    %1647 = vmatpush.bf16.msra.mxu0 %v517
    %1648 = vmatpush.bf16.msra.mxu0 %v513
    %1649 = vmatpush.bf16.msra.mxu0 %v509
    %1650 = vmatpush.bf16.msra.mxu0 %v505
    %1651 = vmatpush.bf16.msra.mxu0 %v501
    %1652 = vmatmul.bf16.gmra.mxu0 %v1483
    %v1653 = vpop.f32.mrf.mxu0
    %v1654 = vadd.f32 0.0, %v1653
    %v1655 = vpop.f32.mrf.mxu0
    %1656 = vdwg.mxu0
    %1657 = vmatpush.bf16.msra.mxu0 %v530
    %1658 = vmatpush.bf16.msra.mxu0 %v526
    %1659 = vmatpush.bf16.msra.mxu0 %v522
    %1660 = vmatpush.bf16.msra.mxu0 %v518
    %1661 = vmatpush.bf16.msra.mxu0 %v514
    %1662 = vmatpush.bf16.msra.mxu0 %v510
    %1663 = vmatpush.bf16.msra.mxu0 %v506
    %1664 = vmatpush.bf16.msra.mxu0 %v502
    %1665 = vmatmul.bf16.gmra.mxu0 %v1483
    %v1666 = vpop.f32.mrf.mxu0
    %v1667 = vadd.f32 0.0, %v1666
    %v1668 = vpop.f32.mrf.mxu0
    %1669 = vdwg.mxu0
    %v1674 = vrot.slane %v1641, 7
    %v1675 = vrot.slane %v1654, 6
    %v1676 = vrot.slane %v1667, 5
    %v1677 = vsel %vm622, %v1628, %v1674
    %v1678 = vsel %vm624, %v1675, %v1676
    %v1679 = vsel %vm626, %v1677, %v1678
    %v1681 = vadd.f32 %v1617, %v1679
    %v1682 = vtanh.pop %v1681
    %v1683 = vmul.f32 %v1682, 0.5
    %v1684 = vadd.f32 %v1683, 0.5
    %v1686 = vrot.slane %v1684, 1
    %v1688 = vmul.f32 %v1686, %v1478
    %v1690 = vrot.slane %v1682, 2
    %v1692 = vmul.f32 %v1684, %v1690
    %v1693 = vadd.f32 %v1688, %v1692
    %v1694 = vtanh.pop %v1693
    %v1695 = vrot.slane %v1684, 3
    %v1697 = vmul.f32 %v1695, %v1694
    %v1698 = vpack.c.bf16 %v1697, %v1697
    %1699 = vmatpush.bf16.msra.mxu0 %v803
    %1700 = vmatpush.bf16.msra.mxu0 %v799
    %1701 = vmatpush.bf16.msra.mxu0 %v795
    %1702 = vmatpush.bf16.msra.mxu0 %v791
    %1703 = vmatpush.bf16.msra.mxu0 %v787
    %1704 = vmatpush.bf16.msra.mxu0 %v783
    %1705 = vmatpush.bf16.msra.mxu0 %v779
    %1706 = vmatpush.bf16.msra.mxu0 %v775
    %1707 = vmatmul.bf16.gmra.mxu0 %v1698
    %v1708 = vpop.f32.mrf.mxu0
    %v1709 = vadd.f32 0.0, %v1708
    %v1710 = vpop.f32.mrf.mxu0
    %1711 = vdwg.mxu0
    %1712 = vmatpush.bf16.msra.mxu0 %v804
    %1713 = vmatpush.bf16.msra.mxu0 %v800
    %1714 = vmatpush.bf16.msra.mxu0 %v796
    %1715 = vmatpush.bf16.msra.mxu0 %v792
    %1716 = vmatpush.bf16.msra.mxu0 %v788
    %1717 = vmatpush.bf16.msra.mxu0 %v784
    %1718 = vmatpush.bf16.msra.mxu0 %v780
    %1719 = vmatpush.bf16.msra.mxu0 %v776
    %1720 = vmatmul.bf16.gmra.mxu0 %v1698
    %v1721 = vpop.f32.mrf.mxu0
    %v1722 = vadd.f32 0.0, %v1721
    %v1723 = vpop.f32.mrf.mxu0
    %1724 = vdwg.mxu0
    %1725 = vmatpush.bf16.msra.mxu0 %v805
    %1726 = vmatpush.bf16.msra.mxu0 %v801
    %1727 = vmatpush.bf16.msra.mxu0 %v797
    %1728 = vmatpush.bf16.msra.mxu0 %v793
    %1729 = vmatpush.bf16.msra.mxu0 %v789
    %1730 = vmatpush.bf16.msra.mxu0 %v785
    %1731 = vmatpush.bf16.msra.mxu0 %v781
    %1732 = vmatpush.bf16.msra.mxu0 %v777
    %1733 = vmatmul.bf16.gmra.mxu0 %v1698
    %v1734 = vpop.f32.mrf.mxu0
    %v1735 = vadd.f32 0.0, %v1734
    %v1736 = vpop.f32.mrf.mxu0
    %1737 = vdwg.mxu0
    %1738 = vmatpush.bf16.msra.mxu0 %v806
    %1739 = vmatpush.bf16.msra.mxu0 %v802
    %1740 = vmatpush.bf16.msra.mxu0 %v798
    %1741 = vmatpush.bf16.msra.mxu0 %v794
    %1742 = vmatpush.bf16.msra.mxu0 %v790
    %1743 = vmatpush.bf16.msra.mxu0 %v786
    %1744 = vmatpush.bf16.msra.mxu0 %v782
    %1745 = vmatpush.bf16.msra.mxu0 %v778
    %1746 = vmatmul.bf16.gmra.mxu0 %v1698
    %v1747 = vpop.f32.mrf.mxu0
    %v1748 = vadd.f32 0.0, %v1747
    %v1749 = vpop.f32.mrf.mxu0
    %1750 = vdwg.mxu0
    %v1751 = vadd.f32 %v1566, %v1709
    %v1752 = vadd.f32 %v1579, %v1722
    %v1753 = vadd.f32 %v1592, %v1735
    %v1754 = vadd.f32 %v1605, %v1748
    %v1755 = vtanh.pop %v1751
    %v1756 = vtanh.pop %v1752
    %v1757 = vtanh.pop %v1753
    %v1758 = vtanh.pop %v1754
    %v1759 = vmul.f32 %v1755, 0.5
    %v1760 = vmul.f32 %v1756, 0.5
    %v1761 = vmul.f32 %v1758, 0.5
    %v1762 = vadd.f32 %v1759, 0.5
    %v1763 = vadd.f32 %v1760, 0.5
    %v1764 = vadd.f32 %v1761, 0.5
    %v1765 = vmul.f32 %v1763, %v1552
    %v1766 = vmul.f32 %v1762, %v1757
    %v1767 = vadd.f32 %v1765, %v1766
    %v1768 = vtanh.pop %v1767
    %v1769 = vmul.f32 %v1764, %v1768
    %v1770 = vpack.c.bf16 %v1769, %v1769
    %1771 = vmatpush.bf16.msra.mxu0 %v270
    %1772 = vmatpush.bf16.msra.mxu0 %v266
    %1773 = vmatpush.bf16.msra.mxu0 %v262
    %1774 = vmatpush.bf16.msra.mxu0 %v258
    %1775 = vmatpush.bf16.msra.mxu0 %v254
    %1776 = vmatpush.bf16.msra.mxu0 %v250
    %1777 = vmatpush.bf16.msra.mxu0 %v246
    %1778 = vmatpush.bf16.msra.mxu0 %v242
    %1779 = vmatmul.bf16.gmra.mxu0 %v1770
    %v1780 = vpop.f32.mrf.mxu0
    %v1781 = vadd.f32 %v307, %v1780
    %v1782 = vpop.f32.mrf.mxu0
    %1783 = vdwg.mxu0
    %1784 = vmatpush.bf16.msra.mxu0 %v271
    %1785 = vmatpush.bf16.msra.mxu0 %v267
    %1786 = vmatpush.bf16.msra.mxu0 %v263
    %1787 = vmatpush.bf16.msra.mxu0 %v259
    %1788 = vmatpush.bf16.msra.mxu0 %v255
    %1789 = vmatpush.bf16.msra.mxu0 %v251
    %1790 = vmatpush.bf16.msra.mxu0 %v247
    %1791 = vmatpush.bf16.msra.mxu0 %v243
    %1792 = vmatmul.bf16.gmra.mxu0 %v1770
    %v1793 = vpop.f32.mrf.mxu0
    %v1794 = vadd.f32 %v308, %v1793
    %v1795 = vpop.f32.mrf.mxu0
    %1796 = vdwg.mxu0
    %1797 = vmatpush.bf16.msra.mxu0 %v272
    %1798 = vmatpush.bf16.msra.mxu0 %v268
    %1799 = vmatpush.bf16.msra.mxu0 %v264
    %1800 = vmatpush.bf16.msra.mxu0 %v260
    %1801 = vmatpush.bf16.msra.mxu0 %v256
    %1802 = vmatpush.bf16.msra.mxu0 %v252
    %1803 = vmatpush.bf16.msra.mxu0 %v248
    %1804 = vmatpush.bf16.msra.mxu0 %v244
    %1805 = vmatmul.bf16.gmra.mxu0 %v1770
    %v1806 = vpop.f32.mrf.mxu0
    %v1807 = vadd.f32 %v309, %v1806
    %v1808 = vpop.f32.mrf.mxu0
    %1809 = vdwg.mxu0
    %1810 = vmatpush.bf16.msra.mxu0 %v273
    %1811 = vmatpush.bf16.msra.mxu0 %v269
    %1812 = vmatpush.bf16.msra.mxu0 %v265
    %1813 = vmatpush.bf16.msra.mxu0 %v261
    %1814 = vmatpush.bf16.msra.mxu0 %v257
    %1815 = vmatpush.bf16.msra.mxu0 %v253
    %1816 = vmatpush.bf16.msra.mxu0 %v249
    %1817 = vmatpush.bf16.msra.mxu0 %v245
    %1818 = vmatmul.bf16.gmra.mxu0 %v1770
    %v1819 = vpop.f32.mrf.mxu0
    %v1820 = vadd.f32 %v310, %v1819
    %v1821 = vpop.f32.mrf.mxu0
    %1822 = vdwg.mxu0
    %s1823 = sadd.s32 0, 5
    %s1824 = sshra.s32 %s1823, 3
    %s1825 = sand.u32 %s1823, 7
    %s1826 = sshra.s32 %s1823, 3
    %s1827 = sand.u32 %s1823, 7
    %s1828 = smul.u32 %s1824, 4
    %s1829 = smul.u32 %s1828, 8
    %s1830 = sadd.s32 %s1829, %s1827
    %s1831 = scalar_lea.vmem [#allocation2], %s1830
    %v1832 = vld [vmem:[%s1831] ss:$8 sm:$0xf]
    %1833 = vmatpush.bf16.msra.mxu0 %v527
    %1834 = vmatpush.bf16.msra.mxu0 %v523
    %1835 = vmatpush.bf16.msra.mxu0 %v519
    %1836 = vmatpush.bf16.msra.mxu0 %v515
    %1837 = vmatpush.bf16.msra.mxu0 %v511
    %1838 = vmatpush.bf16.msra.mxu0 %v507
    %1839 = vmatpush.bf16.msra.mxu0 %v503
    %1840 = vmatpush.bf16.msra.mxu0 %v499
    %1841 = vmatmul.bf16.gmra.mxu0 %v1698
    %v1842 = vpop.f32.mrf.mxu0
    %v1843 = vadd.f32 0.0, %v1842
    %v1844 = vpop.f32.mrf.mxu0
    %1845 = vdwg.mxu0
    %1846 = vmatpush.bf16.msra.mxu0 %v528
    %1847 = vmatpush.bf16.msra.mxu0 %v524
    %1848 = vmatpush.bf16.msra.mxu0 %v520
    %1849 = vmatpush.bf16.msra.mxu0 %v516
    %1850 = vmatpush.bf16.msra.mxu0 %v512
    %1851 = vmatpush.bf16.msra.mxu0 %v508
    %1852 = vmatpush.bf16.msra.mxu0 %v504
    %1853 = vmatpush.bf16.msra.mxu0 %v500
    %1854 = vmatmul.bf16.gmra.mxu0 %v1698
    %v1855 = vpop.f32.mrf.mxu0
    %v1856 = vadd.f32 0.0, %v1855
    %v1857 = vpop.f32.mrf.mxu0
    %1858 = vdwg.mxu0
    %1859 = vmatpush.bf16.msra.mxu0 %v529
    %1860 = vmatpush.bf16.msra.mxu0 %v525
    %1861 = vmatpush.bf16.msra.mxu0 %v521
    %1862 = vmatpush.bf16.msra.mxu0 %v517
    %1863 = vmatpush.bf16.msra.mxu0 %v513
    %1864 = vmatpush.bf16.msra.mxu0 %v509
    %1865 = vmatpush.bf16.msra.mxu0 %v505
    %1866 = vmatpush.bf16.msra.mxu0 %v501
    %1867 = vmatmul.bf16.gmra.mxu0 %v1698
    %v1868 = vpop.f32.mrf.mxu0
    %v1869 = vadd.f32 0.0, %v1868
    %v1870 = vpop.f32.mrf.mxu0
    %1871 = vdwg.mxu0
    %1872 = vmatpush.bf16.msra.mxu0 %v530
    %1873 = vmatpush.bf16.msra.mxu0 %v526
    %1874 = vmatpush.bf16.msra.mxu0 %v522
    %1875 = vmatpush.bf16.msra.mxu0 %v518
    %1876 = vmatpush.bf16.msra.mxu0 %v514
    %1877 = vmatpush.bf16.msra.mxu0 %v510
    %1878 = vmatpush.bf16.msra.mxu0 %v506
    %1879 = vmatpush.bf16.msra.mxu0 %v502
    %1880 = vmatmul.bf16.gmra.mxu0 %v1698
    %v1881 = vpop.f32.mrf.mxu0
    %v1882 = vadd.f32 0.0, %v1881
    %v1883 = vpop.f32.mrf.mxu0
    %1884 = vdwg.mxu0
    %v1889 = vrot.slane %v1856, 7
    %v1890 = vrot.slane %v1869, 6
    %v1891 = vrot.slane %v1882, 5
    %v1892 = vsel %vm622, %v1843, %v1889
    %v1893 = vsel %vm624, %v1890, %v1891
    %v1894 = vsel %vm626, %v1892, %v1893
    %v1896 = vadd.f32 %v1832, %v1894
    %v1897 = vtanh.pop %v1896
    %v1898 = vmul.f32 %v1897, 0.5
    %v1899 = vadd.f32 %v1898, 0.5
    %v1901 = vrot.slane %v1899, 1
    %v1903 = vmul.f32 %v1901, %v1693
    %v1905 = vrot.slane %v1897, 2
    %v1907 = vmul.f32 %v1899, %v1905
    %v1908 = vadd.f32 %v1903, %v1907
    %v1909 = vtanh.pop %v1908
    %v1910 = vrot.slane %v1899, 3
    %v1912 = vmul.f32 %v1910, %v1909
    %v1913 = vpack.c.bf16 %v1912, %v1912
    %1914 = vmatpush.bf16.msra.mxu0 %v803
    %1915 = vmatpush.bf16.msra.mxu0 %v799
    %1916 = vmatpush.bf16.msra.mxu0 %v795
    %1917 = vmatpush.bf16.msra.mxu0 %v791
    %1918 = vmatpush.bf16.msra.mxu0 %v787
    %1919 = vmatpush.bf16.msra.mxu0 %v783
    %1920 = vmatpush.bf16.msra.mxu0 %v779
    %1921 = vmatpush.bf16.msra.mxu0 %v775
    %1922 = vmatmul.bf16.gmra.mxu0 %v1913
    %v1923 = vpop.f32.mrf.mxu0
    %v1924 = vadd.f32 0.0, %v1923
    %v1925 = vpop.f32.mrf.mxu0
    %1926 = vdwg.mxu0
    %1927 = vmatpush.bf16.msra.mxu0 %v804
    %1928 = vmatpush.bf16.msra.mxu0 %v800
    %1929 = vmatpush.bf16.msra.mxu0 %v796
    %1930 = vmatpush.bf16.msra.mxu0 %v792
    %1931 = vmatpush.bf16.msra.mxu0 %v788
    %1932 = vmatpush.bf16.msra.mxu0 %v784
    %1933 = vmatpush.bf16.msra.mxu0 %v780
    %1934 = vmatpush.bf16.msra.mxu0 %v776
    %1935 = vmatmul.bf16.gmra.mxu0 %v1913
    %v1936 = vpop.f32.mrf.mxu0
    %v1937 = vadd.f32 0.0, %v1936
    %v1938 = vpop.f32.mrf.mxu0
    %1939 = vdwg.mxu0
    %1940 = vmatpush.bf16.msra.mxu0 %v805
    %1941 = vmatpush.bf16.msra.mxu0 %v801
    %1942 = vmatpush.bf16.msra.mxu0 %v797
    %1943 = vmatpush.bf16.msra.mxu0 %v793
    %1944 = vmatpush.bf16.msra.mxu0 %v789
    %1945 = vmatpush.bf16.msra.mxu0 %v785
    %1946 = vmatpush.bf16.msra.mxu0 %v781
    %1947 = vmatpush.bf16.msra.mxu0 %v777
    %1948 = vmatmul.bf16.gmra.mxu0 %v1913
    %v1949 = vpop.f32.mrf.mxu0
    %v1950 = vadd.f32 0.0, %v1949
    %v1951 = vpop.f32.mrf.mxu0
    %1952 = vdwg.mxu0
    %1953 = vmatpush.bf16.msra.mxu0 %v806
    %1954 = vmatpush.bf16.msra.mxu0 %v802
    %1955 = vmatpush.bf16.msra.mxu0 %v798
    %1956 = vmatpush.bf16.msra.mxu0 %v794
    %1957 = vmatpush.bf16.msra.mxu0 %v790
    %1958 = vmatpush.bf16.msra.mxu0 %v786
    %1959 = vmatpush.bf16.msra.mxu0 %v782
    %1960 = vmatpush.bf16.msra.mxu0 %v778
    %1961 = vmatmul.bf16.gmra.mxu0 %v1913
    %v1962 = vpop.f32.mrf.mxu0
    %v1963 = vadd.f32 0.0, %v1962
    %v1964 = vpop.f32.mrf.mxu0
    %1965 = vdwg.mxu0
    %v1966 = vadd.f32 %v1781, %v1924
    %v1967 = vadd.f32 %v1794, %v1937
    %v1968 = vadd.f32 %v1807, %v1950
    %v1969 = vadd.f32 %v1820, %v1963
    %v1970 = vtanh.pop %v1966
    %v1971 = vtanh.pop %v1967
    %v1972 = vtanh.pop %v1968
    %v1973 = vtanh.pop %v1969
    %v1974 = vmul.f32 %v1970, 0.5
    %v1975 = vmul.f32 %v1971, 0.5
    %v1976 = vmul.f32 %v1973, 0.5
    %v1977 = vadd.f32 %v1974, 0.5
    %v1978 = vadd.f32 %v1975, 0.5
    %v1979 = vadd.f32 %v1976, 0.5
    %v1980 = vmul.f32 %v1978, %v1767
    %v1981 = vmul.f32 %v1977, %v1972
    %v1982 = vadd.f32 %v1980, %v1981
    %v1983 = vtanh.pop %v1982
    %v1984 = vmul.f32 %v1979, %v1983
    %v1985 = vpack.c.bf16 %v1984, %v1984
    %1986 = vmatpush.bf16.msra.mxu0 %v270
    %1987 = vmatpush.bf16.msra.mxu0 %v266
    %1988 = vmatpush.bf16.msra.mxu0 %v262
    %1989 = vmatpush.bf16.msra.mxu0 %v258
    %1990 = vmatpush.bf16.msra.mxu0 %v254
    %1991 = vmatpush.bf16.msra.mxu0 %v250
    %1992 = vmatpush.bf16.msra.mxu0 %v246
    %1993 = vmatpush.bf16.msra.mxu0 %v242
    %1994 = vmatmul.bf16.gmra.mxu0 %v1985
    %v1995 = vpop.f32.mrf.mxu0
    %v1996 = vadd.f32 %v307, %v1995
    %v1997 = vpop.f32.mrf.mxu0
    %1998 = vdwg.mxu0
    %1999 = vmatpush.bf16.msra.mxu0 %v271
    %2000 = vmatpush.bf16.msra.mxu0 %v267
    %2001 = vmatpush.bf16.msra.mxu0 %v263
    %2002 = vmatpush.bf16.msra.mxu0 %v259
    %2003 = vmatpush.bf16.msra.mxu0 %v255
    %2004 = vmatpush.bf16.msra.mxu0 %v251
    %2005 = vmatpush.bf16.msra.mxu0 %v247
    %2006 = vmatpush.bf16.msra.mxu0 %v243
    %2007 = vmatmul.bf16.gmra.mxu0 %v1985
    %v2008 = vpop.f32.mrf.mxu0
    %v2009 = vadd.f32 %v308, %v2008
    %v2010 = vpop.f32.mrf.mxu0
    %2011 = vdwg.mxu0
    %2012 = vmatpush.bf16.msra.mxu0 %v272
    %2013 = vmatpush.bf16.msra.mxu0 %v268
    %2014 = vmatpush.bf16.msra.mxu0 %v264
    %2015 = vmatpush.bf16.msra.mxu0 %v260
    %2016 = vmatpush.bf16.msra.mxu0 %v256
    %2017 = vmatpush.bf16.msra.mxu0 %v252
    %2018 = vmatpush.bf16.msra.mxu0 %v248
    %2019 = vmatpush.bf16.msra.mxu0 %v244
    %2020 = vmatmul.bf16.gmra.mxu0 %v1985
    %v2021 = vpop.f32.mrf.mxu0
    %v2022 = vadd.f32 %v309, %v2021
    %v2023 = vpop.f32.mrf.mxu0
    %2024 = vdwg.mxu0
    %2025 = vmatpush.bf16.msra.mxu0 %v273
    %2026 = vmatpush.bf16.msra.mxu0 %v269
    %2027 = vmatpush.bf16.msra.mxu0 %v265
    %2028 = vmatpush.bf16.msra.mxu0 %v261
    %2029 = vmatpush.bf16.msra.mxu0 %v257
    %2030 = vmatpush.bf16.msra.mxu0 %v253
    %2031 = vmatpush.bf16.msra.mxu0 %v249
    %2032 = vmatpush.bf16.msra.mxu0 %v245
    %2033 = vmatmul.bf16.gmra.mxu0 %v1985
    %v2034 = vpop.f32.mrf.mxu0
    %v2035 = vadd.f32 %v310, %v2034
    %v2036 = vpop.f32.mrf.mxu0
    %2037 = vdwg.mxu0
    %s2038 = sadd.s32 0, 6
    %s2039 = sshra.s32 %s2038, 3
    %s2040 = sand.u32 %s2038, 7
    %s2041 = sshra.s32 %s2038, 3
    %s2042 = sand.u32 %s2038, 7
    %s2043 = smul.u32 %s2039, 4
    %s2044 = smul.u32 %s2043, 8
    %s2045 = sadd.s32 %s2044, %s2042
    %s2046 = scalar_lea.vmem [#allocation2], %s2045
    %v2047 = vld [vmem:[%s2046] ss:$8 sm:$0xf]
    %2048 = vmatpush.bf16.msra.mxu0 %v527
    %2049 = vmatpush.bf16.msra.mxu0 %v523
    %2050 = vmatpush.bf16.msra.mxu0 %v519
    %2051 = vmatpush.bf16.msra.mxu0 %v515
    %2052 = vmatpush.bf16.msra.mxu0 %v511
    %2053 = vmatpush.bf16.msra.mxu0 %v507
    %2054 = vmatpush.bf16.msra.mxu0 %v503
    %2055 = vmatpush.bf16.msra.mxu0 %v499
    %2056 = vmatmul.bf16.gmra.mxu0 %v1913
    %v2057 = vpop.f32.mrf.mxu0
    %v2058 = vadd.f32 0.0, %v2057
    %v2059 = vpop.f32.mrf.mxu0
    %2060 = vdwg.mxu0
    %2061 = vmatpush.bf16.msra.mxu0 %v528
    %2062 = vmatpush.bf16.msra.mxu0 %v524
    %2063 = vmatpush.bf16.msra.mxu0 %v520
    %2064 = vmatpush.bf16.msra.mxu0 %v516
    %2065 = vmatpush.bf16.msra.mxu0 %v512
    %2066 = vmatpush.bf16.msra.mxu0 %v508
    %2067 = vmatpush.bf16.msra.mxu0 %v504
    %2068 = vmatpush.bf16.msra.mxu0 %v500
    %2069 = vmatmul.bf16.gmra.mxu0 %v1913
    %v2070 = vpop.f32.mrf.mxu0
    %v2071 = vadd.f32 0.0, %v2070
    %v2072 = vpop.f32.mrf.mxu0
    %2073 = vdwg.mxu0
    %2074 = vmatpush.bf16.msra.mxu0 %v529
    %2075 = vmatpush.bf16.msra.mxu0 %v525
    %2076 = vmatpush.bf16.msra.mxu0 %v521
    %2077 = vmatpush.bf16.msra.mxu0 %v517
    %2078 = vmatpush.bf16.msra.mxu0 %v513
    %2079 = vmatpush.bf16.msra.mxu0 %v509
    %2080 = vmatpush.bf16.msra.mxu0 %v505
    %2081 = vmatpush.bf16.msra.mxu0 %v501
    %2082 = vmatmul.bf16.gmra.mxu0 %v1913
    %v2083 = vpop.f32.mrf.mxu0
    %v2084 = vadd.f32 0.0, %v2083
    %v2085 = vpop.f32.mrf.mxu0
    %2086 = vdwg.mxu0
    %2087 = vmatpush.bf16.msra.mxu0 %v530
    %2088 = vmatpush.bf16.msra.mxu0 %v526
    %2089 = vmatpush.bf16.msra.mxu0 %v522
    %2090 = vmatpush.bf16.msra.mxu0 %v518
    %2091 = vmatpush.bf16.msra.mxu0 %v514
    %2092 = vmatpush.bf16.msra.mxu0 %v510
    %2093 = vmatpush.bf16.msra.mxu0 %v506
    %2094 = vmatpush.bf16.msra.mxu0 %v502
    %2095 = vmatmul.bf16.gmra.mxu0 %v1913
    %v2096 = vpop.f32.mrf.mxu0
    %v2097 = vadd.f32 0.0, %v2096
    %v2098 = vpop.f32.mrf.mxu0
    %2099 = vdwg.mxu0
    %v2104 = vrot.slane %v2071, 7
    %v2105 = vrot.slane %v2084, 6
    %v2106 = vrot.slane %v2097, 5
    %v2107 = vsel %vm622, %v2058, %v2104
    %v2108 = vsel %vm624, %v2105, %v2106
    %v2109 = vsel %vm626, %v2107, %v2108
    %v2111 = vadd.f32 %v2047, %v2109
    %v2112 = vtanh.pop %v2111
    %v2113 = vmul.f32 %v2112, 0.5
    %v2114 = vadd.f32 %v2113, 0.5
    %v2116 = vrot.slane %v2114, 1
    %v2118 = vmul.f32 %v2116, %v1908
    %v2120 = vrot.slane %v2112, 2
    %v2122 = vmul.f32 %v2114, %v2120
    %v2123 = vadd.f32 %v2118, %v2122
    %v2124 = vtanh.pop %v2123
    %v2125 = vrot.slane %v2114, 3
    %v2127 = vmul.f32 %v2125, %v2124
    %v2128 = vpack.c.bf16 %v2127, %v2127
    %2129 = vmatpush.bf16.msra.mxu0 %v803
    %2130 = vmatpush.bf16.msra.mxu0 %v799
    %2131 = vmatpush.bf16.msra.mxu0 %v795
    %2132 = vmatpush.bf16.msra.mxu0 %v791
    %2133 = vmatpush.bf16.msra.mxu0 %v787
    %2134 = vmatpush.bf16.msra.mxu0 %v783
    %2135 = vmatpush.bf16.msra.mxu0 %v779
    %2136 = vmatpush.bf16.msra.mxu0 %v775
    %2137 = vmatmul.bf16.gmra.mxu0 %v2128
    %v2138 = vpop.f32.mrf.mxu0
    %v2139 = vadd.f32 0.0, %v2138
    %v2140 = vpop.f32.mrf.mxu0
    %2141 = vdwg.mxu0
    %2142 = vmatpush.bf16.msra.mxu0 %v804
    %2143 = vmatpush.bf16.msra.mxu0 %v800
    %2144 = vmatpush.bf16.msra.mxu0 %v796
    %2145 = vmatpush.bf16.msra.mxu0 %v792
    %2146 = vmatpush.bf16.msra.mxu0 %v788
    %2147 = vmatpush.bf16.msra.mxu0 %v784
    %2148 = vmatpush.bf16.msra.mxu0 %v780
    %2149 = vmatpush.bf16.msra.mxu0 %v776
    %2150 = vmatmul.bf16.gmra.mxu0 %v2128
    %v2151 = vpop.f32.mrf.mxu0
    %v2152 = vadd.f32 0.0, %v2151
    %v2153 = vpop.f32.mrf.mxu0
    %2154 = vdwg.mxu0
    %2155 = vmatpush.bf16.msra.mxu0 %v805
    %2156 = vmatpush.bf16.msra.mxu0 %v801
    %2157 = vmatpush.bf16.msra.mxu0 %v797
    %2158 = vmatpush.bf16.msra.mxu0 %v793
    %2159 = vmatpush.bf16.msra.mxu0 %v789
    %2160 = vmatpush.bf16.msra.mxu0 %v785
    %2161 = vmatpush.bf16.msra.mxu0 %v781
    %2162 = vmatpush.bf16.msra.mxu0 %v777
    %2163 = vmatmul.bf16.gmra.mxu0 %v2128
    %v2164 = vpop.f32.mrf.mxu0
    %v2165 = vadd.f32 0.0, %v2164
    %v2166 = vpop.f32.mrf.mxu0
    %2167 = vdwg.mxu0
    %2168 = vmatpush.bf16.msra.mxu0 %v806
    %2169 = vmatpush.bf16.msra.mxu0 %v802
    %2170 = vmatpush.bf16.msra.mxu0 %v798
    %2171 = vmatpush.bf16.msra.mxu0 %v794
    %2172 = vmatpush.bf16.msra.mxu0 %v790
    %2173 = vmatpush.bf16.msra.mxu0 %v786
    %2174 = vmatpush.bf16.msra.mxu0 %v782
    %2175 = vmatpush.bf16.msra.mxu0 %v778
    %2176 = vmatmul.bf16.gmra.mxu0 %v2128
    %v2177 = vpop.f32.mrf.mxu0
    %v2178 = vadd.f32 0.0, %v2177
    %v2179 = vpop.f32.mrf.mxu0
    %2180 = vdwg.mxu0
    %v2181 = vadd.f32 %v1996, %v2139
    %v2182 = vadd.f32 %v2009, %v2152
    %v2183 = vadd.f32 %v2022, %v2165
    %v2184 = vadd.f32 %v2035, %v2178
    %v2185 = vtanh.pop %v2181
    %v2186 = vtanh.pop %v2182
    %v2187 = vtanh.pop %v2183
    %v2188 = vtanh.pop %v2184
    %v2189 = vmul.f32 %v2185, 0.5
    %v2190 = vmul.f32 %v2186, 0.5
    %v2191 = vmul.f32 %v2188, 0.5
    %v2192 = vadd.f32 %v2189, 0.5
    %v2193 = vadd.f32 %v2190, 0.5
    %v2194 = vadd.f32 %v2191, 0.5
    %v2195 = vmul.f32 %v2193, %v1982
    %v2196 = vmul.f32 %v2192, %v2187
    %v2197 = vadd.f32 %v2195, %v2196
    %v2198 = vtanh.pop %v2197
    %v2199 = vmul.f32 %v2194, %v2198
    %v2200 = vpack.c.bf16 %v2199, %v2199
    %2201 = vmatpush.bf16.msra.mxu0 %v270
    %2202 = vmatpush.bf16.msra.mxu0 %v266
    %2203 = vmatpush.bf16.msra.mxu0 %v262
    %2204 = vmatpush.bf16.msra.mxu0 %v258
    %2205 = vmatpush.bf16.msra.mxu0 %v254
    %2206 = vmatpush.bf16.msra.mxu0 %v250
    %2207 = vmatpush.bf16.msra.mxu0 %v246
    %2208 = vmatpush.bf16.msra.mxu0 %v242
    %2209 = vmatmul.bf16.gmra.mxu0 %v2200
    %v2210 = vpop.f32.mrf.mxu0
    %v2211 = vadd.f32 %v307, %v2210
    %v2212 = vpop.f32.mrf.mxu0
    %2213 = vdwg.mxu0
    %2214 = vmatpush.bf16.msra.mxu0 %v271
    %2215 = vmatpush.bf16.msra.mxu0 %v267
    %2216 = vmatpush.bf16.msra.mxu0 %v263
    %2217 = vmatpush.bf16.msra.mxu0 %v259
    %2218 = vmatpush.bf16.msra.mxu0 %v255
    %2219 = vmatpush.bf16.msra.mxu0 %v251
    %2220 = vmatpush.bf16.msra.mxu0 %v247
    %2221 = vmatpush.bf16.msra.mxu0 %v243
    %2222 = vmatmul.bf16.gmra.mxu0 %v2200
    %v2223 = vpop.f32.mrf.mxu0
    %v2224 = vadd.f32 %v308, %v2223
    %v2225 = vpop.f32.mrf.mxu0
    %2226 = vdwg.mxu0
    %2227 = vmatpush.bf16.msra.mxu0 %v272
    %2228 = vmatpush.bf16.msra.mxu0 %v268
    %2229 = vmatpush.bf16.msra.mxu0 %v264
    %2230 = vmatpush.bf16.msra.mxu0 %v260
    %2231 = vmatpush.bf16.msra.mxu0 %v256
    %2232 = vmatpush.bf16.msra.mxu0 %v252
    %2233 = vmatpush.bf16.msra.mxu0 %v248
    %2234 = vmatpush.bf16.msra.mxu0 %v244
    %2235 = vmatmul.bf16.gmra.mxu0 %v2200
    %v2236 = vpop.f32.mrf.mxu0
    %v2237 = vadd.f32 %v309, %v2236
    %v2238 = vpop.f32.mrf.mxu0
    %2239 = vdwg.mxu0
    %2240 = vmatpush.bf16.msra.mxu0 %v273
    %2241 = vmatpush.bf16.msra.mxu0 %v269
    %2242 = vmatpush.bf16.msra.mxu0 %v265
    %2243 = vmatpush.bf16.msra.mxu0 %v261
    %2244 = vmatpush.bf16.msra.mxu0 %v257
    %2245 = vmatpush.bf16.msra.mxu0 %v253
    %2246 = vmatpush.bf16.msra.mxu0 %v249
    %2247 = vmatpush.bf16.msra.mxu0 %v245
    %2248 = vmatmul.bf16.gmra.mxu0 %v2200
    %v2249 = vpop.f32.mrf.mxu0
    %v2250 = vadd.f32 %v310, %v2249
    %v2251 = vpop.f32.mrf.mxu0
    %2252 = vdwg.mxu0
    %s2253 = sadd.s32 0, 7
    %s2254 = sshra.s32 %s2253, 3
    %s2255 = sand.u32 %s2253, 7
    %s2256 = sshra.s32 %s2253, 3
    %s2257 = sand.u32 %s2253, 7
    %s2258 = smul.u32 %s2254, 4
    %s2259 = smul.u32 %s2258, 8
    %s2260 = sadd.s32 %s2259, %s2257
    %s2261 = scalar_lea.vmem [#allocation2], %s2260
    %v2262 = vld [vmem:[%s2261] ss:$8 sm:$0xf]
    %2263 = vmatpush.bf16.msra.mxu0 %v527
    %2264 = vmatpush.bf16.msra.mxu0 %v523
    %2265 = vmatpush.bf16.msra.mxu0 %v519
    %2266 = vmatpush.bf16.msra.mxu0 %v515
    %2267 = vmatpush.bf16.msra.mxu0 %v511
    %2268 = vmatpush.bf16.msra.mxu0 %v507
    %2269 = vmatpush.bf16.msra.mxu0 %v503
    %2270 = vmatpush.bf16.msra.mxu0 %v499
    %2271 = vmatmul.bf16.gmra.mxu0 %v2128
    %v2272 = vpop.f32.mrf.mxu0
    %v2273 = vadd.f32 0.0, %v2272
    %v2274 = vpop.f32.mrf.mxu0
    %2275 = vdwg.mxu0
    %2276 = vmatpush.bf16.msra.mxu0 %v528
    %2277 = vmatpush.bf16.msra.mxu0 %v524
    %2278 = vmatpush.bf16.msra.mxu0 %v520
    %2279 = vmatpush.bf16.msra.mxu0 %v516
    %2280 = vmatpush.bf16.msra.mxu0 %v512
    %2281 = vmatpush.bf16.msra.mxu0 %v508
    %2282 = vmatpush.bf16.msra.mxu0 %v504
    %2283 = vmatpush.bf16.msra.mxu0 %v500
    %2284 = vmatmul.bf16.gmra.mxu0 %v2128
    %v2285 = vpop.f32.mrf.mxu0
    %v2286 = vadd.f32 0.0, %v2285
    %v2287 = vpop.f32.mrf.mxu0
    %2288 = vdwg.mxu0
    %2289 = vmatpush.bf16.msra.mxu0 %v529
    %2290 = vmatpush.bf16.msra.mxu0 %v525
    %2291 = vmatpush.bf16.msra.mxu0 %v521
    %2292 = vmatpush.bf16.msra.mxu0 %v517
    %2293 = vmatpush.bf16.msra.mxu0 %v513
    %2294 = vmatpush.bf16.msra.mxu0 %v509
    %2295 = vmatpush.bf16.msra.mxu0 %v505
    %2296 = vmatpush.bf16.msra.mxu0 %v501
    %2297 = vmatmul.bf16.gmra.mxu0 %v2128
    %v2298 = vpop.f32.mrf.mxu0
    %v2299 = vadd.f32 0.0, %v2298
    %v2300 = vpop.f32.mrf.mxu0
    %2301 = vdwg.mxu0
    %2302 = vmatpush.bf16.msra.mxu0 %v530
    %2303 = vmatpush.bf16.msra.mxu0 %v526
    %2304 = vmatpush.bf16.msra.mxu0 %v522
    %2305 = vmatpush.bf16.msra.mxu0 %v518
    %2306 = vmatpush.bf16.msra.mxu0 %v514
    %2307 = vmatpush.bf16.msra.mxu0 %v510
    %2308 = vmatpush.bf16.msra.mxu0 %v506
    %2309 = vmatpush.bf16.msra.mxu0 %v502
    %2310 = vmatmul.bf16.gmra.mxu0 %v2128
    %v2311 = vpop.f32.mrf.mxu0
    %v2312 = vadd.f32 0.0, %v2311
    %v2313 = vpop.f32.mrf.mxu0
    %2314 = vdwg.mxu0
    %v2319 = vrot.slane %v2286, 7
    %v2320 = vrot.slane %v2299, 6
    %v2321 = vrot.slane %v2312, 5
    %v2322 = vsel %vm622, %v2273, %v2319
    %v2323 = vsel %vm624, %v2320, %v2321
    %v2324 = vsel %vm626, %v2322, %v2323
    %v2326 = vadd.f32 %v2262, %v2324
    %v2327 = vtanh.pop %v2326
    %v2328 = vmul.f32 %v2327, 0.5
    %v2329 = vadd.f32 %v2328, 0.5
    %v2331 = vrot.slane %v2329, 1
    %v2333 = vmul.f32 %v2331, %v2123
    %v2335 = vrot.slane %v2327, 2
    %v2337 = vmul.f32 %v2329, %v2335
    %v2338 = vadd.f32 %v2333, %v2337
    %v2339 = vtanh.pop %v2338
    %v2340 = vrot.slane %v2329, 3
    %v2342 = vmul.f32 %v2340, %v2339
    %v2343 = vpack.c.bf16 %v2342, %v2342
    %2344 = vmatpush.bf16.msra.mxu0 %v803
    %2345 = vmatpush.bf16.msra.mxu0 %v799
    %2346 = vmatpush.bf16.msra.mxu0 %v795
    %2347 = vmatpush.bf16.msra.mxu0 %v791
    %2348 = vmatpush.bf16.msra.mxu0 %v787
    %2349 = vmatpush.bf16.msra.mxu0 %v783
    %2350 = vmatpush.bf16.msra.mxu0 %v779
    %2351 = vmatpush.bf16.msra.mxu0 %v775
    %2352 = vmatmul.bf16.gmra.mxu0 %v2343
    %v2353 = vpop.f32.mrf.mxu0
    %v2354 = vadd.f32 0.0, %v2353
    %v2355 = vpop.f32.mrf.mxu0
    %2356 = vdwg.mxu0
    %2357 = vmatpush.bf16.msra.mxu0 %v804
    %2358 = vmatpush.bf16.msra.mxu0 %v800
    %2359 = vmatpush.bf16.msra.mxu0 %v796
    %2360 = vmatpush.bf16.msra.mxu0 %v792
    %2361 = vmatpush.bf16.msra.mxu0 %v788
    %2362 = vmatpush.bf16.msra.mxu0 %v784
    %2363 = vmatpush.bf16.msra.mxu0 %v780
    %2364 = vmatpush.bf16.msra.mxu0 %v776
    %2365 = vmatmul.bf16.gmra.mxu0 %v2343
    %v2366 = vpop.f32.mrf.mxu0
    %v2367 = vadd.f32 0.0, %v2366
    %v2368 = vpop.f32.mrf.mxu0
    %2369 = vdwg.mxu0
    %2370 = vmatpush.bf16.msra.mxu0 %v805
    %2371 = vmatpush.bf16.msra.mxu0 %v801
    %2372 = vmatpush.bf16.msra.mxu0 %v797
    %2373 = vmatpush.bf16.msra.mxu0 %v793
    %2374 = vmatpush.bf16.msra.mxu0 %v789
    %2375 = vmatpush.bf16.msra.mxu0 %v785
    %2376 = vmatpush.bf16.msra.mxu0 %v781
    %2377 = vmatpush.bf16.msra.mxu0 %v777
    %2378 = vmatmul.bf16.gmra.mxu0 %v2343
    %v2379 = vpop.f32.mrf.mxu0
    %v2380 = vadd.f32 0.0, %v2379
    %v2381 = vpop.f32.mrf.mxu0
    %2382 = vdwg.mxu0
    %2383 = vmatpush.bf16.msra.mxu0 %v806
    %2384 = vmatpush.bf16.msra.mxu0 %v802
    %2385 = vmatpush.bf16.msra.mxu0 %v798
    %2386 = vmatpush.bf16.msra.mxu0 %v794
    %2387 = vmatpush.bf16.msra.mxu0 %v790
    %2388 = vmatpush.bf16.msra.mxu0 %v786
    %2389 = vmatpush.bf16.msra.mxu0 %v782
    %2390 = vmatpush.bf16.msra.mxu0 %v778
    %2391 = vmatmul.bf16.gmra.mxu0 %v2343
    %v2392 = vpop.f32.mrf.mxu0
    %v2393 = vadd.f32 0.0, %v2392
    %v2394 = vpop.f32.mrf.mxu0
    %2395 = vdwg.mxu0
    %v2396 = vadd.f32 %v2211, %v2354
    %v2397 = vadd.f32 %v2224, %v2367
    %v2398 = vadd.f32 %v2237, %v2380
    %v2399 = vadd.f32 %v2250, %v2393
    %v2400 = vtanh.pop %v2396
    %v2401 = vtanh.pop %v2397
    %v2402 = vtanh.pop %v2398
    %v2403 = vtanh.pop %v2399
    %v2404 = vmul.f32 %v2400, 0.5
    %v2405 = vmul.f32 %v2401, 0.5
    %v2406 = vmul.f32 %v2403, 0.5
    %v2407 = vadd.f32 %v2404, 0.5
    %v2408 = vadd.f32 %v2405, 0.5
    %v2409 = vadd.f32 %v2406, 0.5
    %v2410 = vmul.f32 %v2408, %v2197
    %v2411 = vmul.f32 %v2407, %v2402
    %v2412 = vadd.f32 %v2410, %v2411
    %v2413 = vtanh.pop %v2412
    %v2414 = vmul.f32 %v2409, %v2413
    %v2416 = vrot.slane %v1124, 7
    %v2419 = vrot.slane %v1339, 6
    %v2422 = vrot.slane %v1554, 5
    %v2425 = vrot.slane %v1769, 4
    %v2428 = vrot.slane %v1984, 3
    %v2431 = vrot.slane %v2199, 2
    %v2434 = vrot.slane %v2414, 1
    %v2436 = vsel %vm622, %v909, %v2416
    %v2437 = vsel %vm626, %v2436, %v2419
    %vm2438 = vcmask 1042432
    %v2439 = vsel %vm2438, %v2437, %v2422
    %vm2440 = vcmask 1043456
    %v2441 = vsel %vm2440, %v2439, %v2425
    %vm2442 = vcmask 1044480
    %v2443 = vsel %vm2442, %v2441, %v2428
    %vm2444 = vcmask 1045504
    %v2445 = vsel %vm2444, %v2443, %v2431
    %vm2446 = vcmask 1046528
    %v2447 = vsel %vm2446, %v2445, %v2434
    %2448 = vst [vmem:[#allocation9] sm:$0xff] %v2447
    // Predicated region
    $region42: #{tpu_custom_call.1} parent=1 // pred_check
      _
    $region43: #{tpu_custom_call.1} parent=1 // pred_check_branch
      %2450 = sbr.rel (0) target = $region45
    $region44: #{tpu_custom_call.1} parent=1 // pred_region
      %2452 = vsyncadd [#allocation5], 0
      %s2454 = sshll.u32 [#allocation9], 4
      %s2455 = int_to_ptr.vmem [resolvable:$true] %s2454
      %s2456 = sshll.u32 %s7, 4
      %s2457 = int_to_ptr.hbm [resolvable:$true] %s2456
      %2459 = dma.vmem_to_hbm [thread:$0]  %s2455, 128, %s2457, [#allocation5]
    $region45: #{tpu_custom_call.1} parent=1 // pred_fallthru
      _
    // Predicated region
    $region46: #{tpu_custom_call.1} parent=1 // pred_check
      _
    $region47: #{tpu_custom_call.1} parent=1 // pred_check_branch
      %2461 = sbr.rel (0) target = $region49
    $region48: #{tpu_custom_call.1} parent=1 // pred_region
      %2463 = dma.done [#allocation5], 128
    $region49: #{tpu_custom_call.1} parent=1 // pred_fallthru
      _
    %2464 = vsyncpa [#allocation4], 1
    %2465 = vsyncpa [#allocation7], 1
    %2466 = vsyncpa [#allocation5], 1

</llo_original>
